<compile_context>
chip_gen: v6e
topology: v6e:2x2x1
jax: 0.10.0
libtpu: 0.0.40
codegen_flags: <defaults>
</compile_context>

<pallas_src>
import math

import jax
import jax.numpy as jnp
from jax.experimental import pallas as pl
from jax.experimental.pallas import tpu as pltpu

BN_EPS = 1e-5                    # nn.BatchNorm2d default
NORM_EPS = 1e-12                 # F.normalize default
_INV_SQRT2 = 1.0 / math.sqrt(2.0)


# ----------------------------------------------------------------------------
# Shared math (used both inside the Pallas kernel and by the pure-JAX reference,
# so the two follow bit-identical numerics).
# ----------------------------------------------------------------------------
def _gelu_exact(x):
    # nn.GELU() default: exact erf-based GELU (computed in f32).
    return 0.5 * x * (1.0 + jax.lax.erf(x * _INV_SQRT2))


def _l2_normalize(v):
    # F.normalize(..., dim=-1): v / max(||v||, eps)
    n = jnp.sqrt(jnp.sum(v * v, axis=-1, keepdims=True))
    return v / jnp.maximum(n, NORM_EPS)


def _head_and_dots(x, w1, w2, w3, b1, b2, b3, slots, matmul_dtype):
    """Folded DINOHead2d (eval-mode BN) + SemanticGrouping cosine map.

    Matmuls run in `matmul_dtype` (bf16 -> native MXU path) with f32 accumulation;
    bias adds, GELU and normalization stay in f32 (v5e VPU/EUP have no bf16).
    """
    cdt = matmul_dtype
    h = jnp.dot(x.astype(cdt), w1.astype(cdt), preferred_element_type=jnp.float32) + b1
    h = _gelu_exact(h)
    h = jnp.dot(h.astype(cdt), w2.astype(cdt), preferred_element_type=jnp.float32) + b2
    h = _gelu_exact(h)
    y = jnp.dot(h.astype(cdt), w3.astype(cdt), preferred_element_type=jnp.float32) + b3

    y_n = _l2_normalize(y)                              # per-pixel feature, f32
    s_n = _l2_normalize(slots.astype(jnp.float32))      # per-prototype, f32
    # dots[n, k] = <y_n[n], s_n[k]>   (contract last dims; no explicit transpose)
    dots = jax.lax.dot_general(
        y_n.astype(cdt), s_n.astype(cdt),
        (((1,), (1,)), ((), ())), preferred_element_type=jnp.float32)
    return dots


# ----------------------------------------------------------------------------
# Pallas kernel: one row-tile of pixels per grid step, all weights resident.
# ----------------------------------------------------------------------------
def slotcon_eval_kernel(x_ref, w1_ref, w2_ref, w3_ref, bias_ref, slots_ref, dots_ref):
    hidden = w1_ref.shape[1]
    d_out = w3_ref.shape[1]

    bias = bias_ref[...]                 # (8, P) packed: row0=b1', row1=b2', row2=b3
    b1 = bias[0:1, :hidden]
    b2 = bias[1:2, :hidden]
    b3 = bias[2:3, :d_out]

    dots = _head_and_dots(
        x_ref[...], w1_ref[...], w2_ref[...], w3_ref[...],
        b1, b2, b3, slots_ref[...], w1_ref.dtype)
    dots_ref[...] = dots.astype(dots_ref.dtype)


# ----------------------------------------------------------------------------
# Parameter handling
# ----------------------------------------------------------------------------
def _round_up(n, m):
    return ((n + m - 1) // m) * m


def init_raw_params(key, in_dim, hidden_dim, bottleneck_dim, num_prototypes):
    """Frozen SlotConEval parameters (PyTorch-equivalent layout, weights as (in, out)).

    Conv weights ~ trunc_normal(std=0.02) (plain normal*0.02 is numerically identical
    at that std), conv biases = 0 (DINOHead._init_weights).  BN affine/running stats
    are randomized so the eval-mode fold is actually exercised.
    """
    ks = jax.random.split(key, 12)

    def w_init(k, shape):
        return jax.random.normal(k, shape, jnp.float32) * 0.02

    def bn_init(kg, kb, km, kv, dim):
        return dict(
            gamma=1.0 + 0.1 * jax.random.normal(kg, (dim,), jnp.float32),
            beta=0.1 * jax.random.normal(kb, (dim,), jnp.float32),
            mean=0.1 * jax.random.normal(km, (dim,), jnp.float32),
            var=jax.random.uniform(kv, (dim,), jnp.float32, minval=0.5, maxval=1.5),
        )

    return {
        "w1": w_init(ks[0], (in_dim, hidden_dim)),
        "b1": jnp.zeros((hidden_dim,), jnp.float32),
        "bn1": bn_init(ks[1], ks[2], ks[3], ks[4], hidden_dim),
        "w2": w_init(ks[5], (hidden_dim, hidden_dim)),
        "b2": jnp.zeros((hidden_dim,), jnp.float32),
        "bn2": bn_init(ks[6], ks[7], ks[8], ks[9], hidden_dim),
        "w3": w_init(ks[10], (hidden_dim, bottleneck_dim)),
        "b3": jnp.zeros((bottleneck_dim,), jnp.float32),
        "slots": jax.random.normal(ks[11], (num_prototypes, bottleneck_dim), jnp.float32),
    }


def fold_params(raw, matmul_dtype=jnp.bfloat16):
    """Fold eval-mode BatchNorm into the preceding 1x1 conv (exact affine fold) and
    pack all per-feature bias vectors into a single (8, P) array (one DMA)."""

    def fold(w, b, bn):
        scale = bn["gamma"] / jnp.sqrt(bn["var"] + BN_EPS)        # (out,)
        return w * scale[None, :], (b - bn["mean"]) * scale + bn["beta"]

    w1f, b1f = fold(raw["w1"], raw["b1"], raw["bn1"])
    w2f, b2f = fold(raw["w2"], raw["b2"], raw["bn2"])
    w3, b3 = raw["w3"], raw["b3"]

    hidden = w1f.shape[1]
    d_out = w3.shape[1]
    pmax = max(hidden, d_out)
    bias_pack = jnp.zeros((8, pmax), jnp.float32)
    bias_pack = bias_pack.at[0, :hidden].set(b1f)
    bias_pack = bias_pack.at[1, :hidden].set(b2f)
    bias_pack = bias_pack.at[2, :d_out].set(b3)

    return {
        "w1": w1f.astype(matmul_dtype),
        "w2": w2f.astype(matmul_dtype),
        "w3": w3.astype(matmul_dtype),
        "bias_pack": bias_pack,                 # f32
        "slots": raw["slots"].astype(jnp.float32),
    }


# ----------------------------------------------------------------------------
# Wrapper
# ----------------------------------------------------------------------------
def slotcon_eval_forward(feat, kparams, *, tile_n=512):
    """feat: (B, C, H, W) backbone feature map  ->  probs: (B, K, H, W)."""
    B, C, H, W = feat.shape
    K, d_out = kparams["slots"].shape
    hidden = kparams["w1"].shape[1]

    # 1x1 convs act per pixel: flatten the spatial/batch axes into rows.
    x = jnp.transpose(feat, (0, 2, 3, 1)).reshape(B * H * W, C)
    n = x.shape[0]

    tile_n = max(8, min(tile_n, _round_up(n, 8)))
    tile_n = _round_up(tile_n, 8)
    n_pad = _round_up(n, tile_n)
    if n_pad != n:
        x = jnp.pad(x, ((0, n_pad - n), (0, 0)))   # zero rows; no cross-row coupling
    grid_n = n_pad // tile_n

    flops = 2 * n_pad * (C * hidden + hidden * hidden + hidden * d_out + d_out * K)
    transcendentals = 2 * n_pad * hidden + n_pad + K        # 2x erf layers + L2 norms
    bytes_accessed = (
        x.size * x.dtype.itemsize
        + sum(kparams[k].size * kparams[k].dtype.itemsize
              for k in ("w1", "w2", "w3", "bias_pack", "slots"))
        + n_pad * K * 4)

    dots_flat = pl.pallas_call(
        slotcon_eval_kernel,
        out_shape=jax.ShapeDtypeStruct((n_pad, K), jnp.float32),
        grid=(grid_n,),
        in_specs=[
            pl.BlockSpec((tile_n, C), lambda i: (i, 0)),                 # pixel rows (tiled)
            pl.BlockSpec(kparams["w1"].shape, lambda i: (0, 0)),         # resident weights
            pl.BlockSpec(kparams["w2"].shape, lambda i: (0, 0)),
            pl.BlockSpec(kparams["w3"].shape, lambda i: (0, 0)),
            pl.BlockSpec(kparams["bias_pack"].shape, lambda i: (0, 0)),  # packed biases
            pl.BlockSpec(kparams["slots"].shape, lambda i: (0, 0)),      # slot prototypes
        ],
        out_specs=pl.BlockSpec((tile_n, K), lambda i: (i, 0)),           # lane-dense output
        compiler_params=pltpu.CompilerParams(
            dimension_semantics=("parallel",)),                          # v7x 2-TC sharding
        cost_estimate=pl.CostEstimate(
            flops=int(flops),
            transcendentals=int(transcendentals),
            bytes_accessed=int(bytes_accessed)),
    )(x, kparams["w1"], kparams["w2"], kparams["w3"],
      kparams["bias_pack"], kparams["slots"])

    dots_flat = dots_flat[:n]
    return dots_flat.reshape(B, H, W, K).transpose(0, 3, 1, 2)           # -> (B, K, H, W)


def reference_forward(feat, kparams):
    """Pure-JAX reference performing the identical (folded, mixed-precision) math."""
    B, C, H, W = feat.shape
    K, d_out = kparams["slots"].shape
    hidden = kparams["w1"].shape[1]
    x = jnp.transpose(feat, (0, 2, 3, 1)).reshape(B * H * W, C)
    b1 = kparams["bias_pack"][0:1, :hidden]
    b2 = kparams["bias_pack"][1:2, :hidden]
    b3 = kparams["bias_pack"][2:3, :d_out]
    dots = _head_and_dots(x, kparams["w1"], kparams["w2"], kparams["w3"],
                          b1, b2, b3, kparams["slots"], kparams["w1"].dtype)
    return dots.reshape(B, H, W, K).transpose(0, 3, 1, 2)


if __name__ == "__main__":
    # Small shapes consistent with the module: vit_tiny channels (192), 16x16 feature
    # map, scaled-down hidden / dim_out / num_prototypes (real: 4096 / 256 / 256).
    B, C_IN, H, W = 2, 192, 16, 16
    HIDDEN, DIM_OUT, N_PROTO = 256, 128, 128

    key = jax.random.PRNGKey(0)
    kx, kp = jax.random.split(key)
    feat = jax.random.normal(kx, (B, C_IN, H, W), jnp.float32)   # stand-in encoder output
    raw = init_raw_params(kp, C_IN, HIDDEN, DIM_OUT, N_PROTO)
    kparams = fold_params(raw, matmul_dtype=jnp.bfloat16)

    # tile_n=128 -> grid of 4 row tiles (exercises the pipelined / parallel grid).
    probs = slotcon_eval_forward(feat, kparams, tile_n=128)
    probs = jax.block_until_ready(probs)

    ref = reference_forward(feat, kparams)
    assert probs.shape == (B, N_PROTO, H, W), probs.shape
    assert bool(jnp.all(jnp.isfinite(probs)))
    err = float(jnp.max(jnp.abs(probs - ref)))
    assert err < 2e-3, err
    print("KERNEL_OK")
</pallas_src>

<mosaic_0001>
module attributes {stable_mosaic.version = 11 : i64} {
  func.func @slotcon_eval_kernel(%arg0: i32, %arg1: memref<128x192xf32, #tpu.memory_space<vmem>>, %arg2: memref<192x256xbf16, #tpu.memory_space<vmem>>, %arg3: memref<256x256xbf16, #tpu.memory_space<vmem>>, %arg4: memref<256x128xbf16, #tpu.memory_space<vmem>>, %arg5: memref<8x256xf32, #tpu.memory_space<vmem>>, %arg6: memref<128x128xf32, #tpu.memory_space<vmem>>, %arg7: memref<128x128xf32, #tpu.memory_space<vmem>>) attributes {dimension_semantics = [#tpu.dimension_semantics<parallel>], iteration_bounds = array<i64: 4>, scalar_prefetch = 0 : i64, scratch_operands = 0 : i64, tpu.core_type = #tpu.core_type<tc>, window_params = [{transform_indices = @transform_0, window_bounds = array<i64: 128, 192>}, {pipeline_mode = #tpu.pipeline_mode<synchronous>, transform_indices = @transform_1, window_bounds = array<i64: 192, 256>}, {pipeline_mode = #tpu.pipeline_mode<synchronous>, transform_indices = @transform_2, window_bounds = array<i64: 256, 256>}, {pipeline_mode = #tpu.pipeline_mode<synchronous>, transform_indices = @transform_3, window_bounds = array<i64: 256, 128>}, {pipeline_mode = #tpu.pipeline_mode<synchronous>, transform_indices = @transform_4, window_bounds = array<i64: 8, 256>}, {pipeline_mode = #tpu.pipeline_mode<synchronous>, transform_indices = @transform_5, window_bounds = array<i64: 128, 128>}, {transform_indices = @transform_6, window_bounds = array<i64: 128, 128>}]} {
    %c0 = arith.constant 0 : index
    %c0_0 = arith.constant 0 : index
    %0 = vector.load %arg5[%c0, %c0_0] : memref<8x256xf32, #tpu.memory_space<vmem>>, vector<8x256xf32>
    %1 = vector.extract_strided_slice %0 {offsets = [0, 0], sizes = [1, 256], strides = [1, 1]} : vector<8x256xf32> to vector<1x256xf32>
    %2 = vector.extract_strided_slice %0 {offsets = [1, 0], sizes = [1, 256], strides = [1, 1]} : vector<8x256xf32> to vector<1x256xf32>
    %3 = vector.extract_strided_slice %0 {offsets = [2, 0], sizes = [1, 128], strides = [1, 1]} : vector<8x256xf32> to vector<1x128xf32>
    %c0_1 = arith.constant 0 : index
    %c0_2 = arith.constant 0 : index
    %4 = vector.load %arg1[%c0_1, %c0_2] : memref<128x192xf32, #tpu.memory_space<vmem>>, vector<128x192xf32>
    %c0_3 = arith.constant 0 : index
    %c0_4 = arith.constant 0 : index
    %5 = vector.load %arg2[%c0_3, %c0_4] : memref<192x256xbf16, #tpu.memory_space<vmem>>, vector<192x256xbf16>
    %c0_5 = arith.constant 0 : index
    %c0_6 = arith.constant 0 : index
    %6 = vector.load %arg3[%c0_5, %c0_6] : memref<256x256xbf16, #tpu.memory_space<vmem>>, vector<256x256xbf16>
    %c0_7 = arith.constant 0 : index
    %c0_8 = arith.constant 0 : index
    %7 = vector.load %arg4[%c0_7, %c0_8] : memref<256x128xbf16, #tpu.memory_space<vmem>>, vector<256x128xbf16>
    %c0_9 = arith.constant 0 : index
    %c0_10 = arith.constant 0 : index
    %8 = vector.load %arg6[%c0_9, %c0_10] : memref<128x128xf32, #tpu.memory_space<vmem>>, vector<128x128xf32>
    %9 = arith.truncf %4 : vector<128x192xf32> to vector<128x192xbf16>
    %cst = arith.constant dense<0.000000e+00> : vector<128x256xf32>
    %10 = tpu.matmul %9, %5, %cst {dimension_numbers = #tpu.dot_dimension_numbers<[1], [0], [0], [1], [0, 0, 1, 1], [], []>} : vector<128x192xbf16>, vector<192x256xbf16>, vector<128x256xf32> -> vector<128x256xf32>
    %11 = vector.broadcast %1 : vector<1x256xf32> to vector<128x256xf32>
    %12 = arith.addf %10, %11 : vector<128x256xf32>
    %cst_11 = arith.constant 5.000000e-01 : f32
    %13 = vector.broadcast %cst_11 : f32 to vector<128x256xf32>
    %14 = arith.mulf %13, %12 : vector<128x256xf32>
    %cst_12 = arith.constant 0.707106769 : f32
    %15 = vector.broadcast %cst_12 : f32 to vector<128x256xf32>
    %16 = arith.mulf %12, %15 : vector<128x256xf32>
    %17 = math.erf %16 : vector<128x256xf32>
    %cst_13 = arith.constant 1.000000e+00 : f32
    %18 = vector.broadcast %cst_13 : f32 to vector<128x256xf32>
    %19 = arith.addf %18, %17 : vector<128x256xf32>
    %20 = arith.mulf %14, %19 : vector<128x256xf32>
    %21 = arith.truncf %20 : vector<128x256xf32> to vector<128x256xbf16>
    %cst_14 = arith.constant dense<0.000000e+00> : vector<128x256xf32>
    %22 = tpu.matmul %21, %6, %cst_14 {dimension_numbers = #tpu.dot_dimension_numbers<[1], [0], [0], [1], [0, 0, 1, 1], [], []>} : vector<128x256xbf16>, vector<256x256xbf16>, vector<128x256xf32> -> vector<128x256xf32>
    %23 = vector.broadcast %2 : vector<1x256xf32> to vector<128x256xf32>
    %24 = arith.addf %22, %23 : vector<128x256xf32>
    %cst_15 = arith.constant 5.000000e-01 : f32
    %25 = vector.broadcast %cst_15 : f32 to vector<128x256xf32>
    %26 = arith.mulf %25, %24 : vector<128x256xf32>
    %cst_16 = arith.constant 0.707106769 : f32
    %27 = vector.broadcast %cst_16 : f32 to vector<128x256xf32>
    %28 = arith.mulf %24, %27 : vector<128x256xf32>
    %29 = math.erf %28 : vector<128x256xf32>
    %cst_17 = arith.constant 1.000000e+00 : f32
    %30 = vector.broadcast %cst_17 : f32 to vector<128x256xf32>
    %31 = arith.addf %30, %29 : vector<128x256xf32>
    %32 = arith.mulf %26, %31 : vector<128x256xf32>
    %33 = arith.truncf %32 : vector<128x256xf32> to vector<128x256xbf16>
    %cst_18 = arith.constant dense<0.000000e+00> : vector<128x128xf32>
    %34 = tpu.matmul %33, %7, %cst_18 {dimension_numbers = #tpu.dot_dimension_numbers<[1], [0], [0], [1], [0, 0, 1, 1], [], []>} : vector<128x256xbf16>, vector<256x128xbf16>, vector<128x128xf32> -> vector<128x128xf32>
    %35 = vector.broadcast %3 : vector<1x128xf32> to vector<128x128xf32>
    %36 = arith.addf %34, %35 : vector<128x128xf32>
    %37 = arith.mulf %36, %36 : vector<128x128xf32>
    %cst_19 = arith.constant dense<0.000000e+00> : vector<128xf32>
    %38 = vector.multi_reduction <add>, %37, %cst_19 [1] : vector<128x128xf32> to vector<128xf32>
    %39 = vector.shape_cast %38 : vector<128xf32> to vector<128x1xf32>
    %40 = math.sqrt %39 : vector<128x1xf32>
    %cst_20 = arith.constant 9.99999996E-13 : f32
    %41 = vector.broadcast %cst_20 : f32 to vector<128x1xf32>
    %42 = arith.maximumf %40, %41 : vector<128x1xf32>
    %43 = vector.broadcast %42 : vector<128x1xf32> to vector<128x128xf32>
    %44 = arith.divf %36, %43 : vector<128x128xf32>
    %45 = arith.mulf %8, %8 : vector<128x128xf32>
    %cst_21 = arith.constant dense<0.000000e+00> : vector<128xf32>
    %46 = vector.multi_reduction <add>, %45, %cst_21 [1] : vector<128x128xf32> to vector<128xf32>
    %47 = vector.shape_cast %46 : vector<128xf32> to vector<128x1xf32>
    %48 = math.sqrt %47 : vector<128x1xf32>
    %cst_22 = arith.constant 9.99999996E-13 : f32
    %49 = vector.broadcast %cst_22 : f32 to vector<128x1xf32>
    %50 = arith.maximumf %48, %49 : vector<128x1xf32>
    %51 = vector.broadcast %50 : vector<128x1xf32> to vector<128x128xf32>
    %52 = arith.divf %8, %51 : vector<128x128xf32>
    %53 = arith.truncf %44 : vector<128x128xf32> to vector<128x128xbf16>
    %54 = arith.truncf %52 : vector<128x128xf32> to vector<128x128xbf16>
    %cst_23 = arith.constant dense<0.000000e+00> : vector<128x128xf32>
    %55 = tpu.matmul %53, %54, %cst_23 {dimension_numbers = #tpu.dot_dimension_numbers<[1], [1], [0], [0], [0, 0, 1, 0], [], []>} : vector<128x128xbf16>, vector<128x128xbf16>, vector<128x128xf32> -> vector<128x128xf32>
    %c0_24 = arith.constant 0 : index
    %c0_25 = arith.constant 0 : index
    %56 = vector.load %arg7[%c0_24, %c0_25] : memref<128x128xf32, #tpu.memory_space<vmem>>, vector<128x128xf32>
    tpu.vector_store %arg7[%c0_24, %c0_25], %55 {strides = array<i32>} : memref<128x128xf32, #tpu.memory_space<vmem>>, vector<128x128xf32>,
    return
  }
  func.func @transform_0(%arg0: i32) -> (i32, i32) {
    %c0_i32 = arith.constant 0 : i32
    %c0_i32_0 = arith.constant 0 : i32
    return %arg0, %c0_i32 : i32, i32
  }
  func.func @transform_1(%arg0: i32) -> (i32, i32) {
    %c0_i32 = arith.constant 0 : i32
    %c0_i32_0 = arith.constant 0 : i32
    %c0_i32_1 = arith.constant 0 : i32
    return %c0_i32, %c0_i32_0 : i32, i32
  }
  func.func @transform_2(%arg0: i32) -> (i32, i32) {
    %c0_i32 = arith.constant 0 : i32
    %c0_i32_0 = arith.constant 0 : i32
    %c0_i32_1 = arith.constant 0 : i32
    return %c0_i32, %c0_i32_0 : i32, i32
  }
  func.func @transform_3(%arg0: i32) -> (i32, i32) {
    %c0_i32 = arith.constant 0 : i32
    %c0_i32_0 = arith.constant 0 : i32
    %c0_i32_1 = arith.constant 0 : i32
    return %c0_i32, %c0_i32_0 : i32, i32
  }
  func.func @transform_4(%arg0: i32) -> (i32, i32) {
    %c0_i32 = arith.constant 0 : i32
    %c0_i32_0 = arith.constant 0 : i32
    %c0_i32_1 = arith.constant 0 : i32
    return %c0_i32, %c0_i32_0 : i32, i32
  }
  func.func @transform_5(%arg0: i32) -> (i32, i32) {
    %c0_i32 = arith.constant 0 : i32
    %c0_i32_0 = arith.constant 0 : i32
    %c0_i32_1 = arith.constant 0 : i32
    return %c0_i32, %c0_i32_0 : i32, i32
  }
  func.func @transform_6(%arg0: i32) -> (i32, i32) {
    %c0_i32 = arith.constant 0 : i32
    %c0_i32_0 = arith.constant 0 : i32
    return %arg0, %c0_i32 : i32, i32
  }
}

</mosaic_0001>

<llo_original>
// kernel: tpu_custom_call.1
$region0: #{tpu_custom_call.1}
  #allocation0 [shape = 'u32[]', space=smem, size = 0x4, offset = 0x4, fixed_abs, tag = 'smem constant byte address 0x4 - core index']
  #allocation1 [shape = 'u32[144,128]{1,0:T(1,128)}', space=vmem, size = 0x12000, scoped, tag = 'internal scratch']
  %s0 = inlined_call_operand.vmem [shape: f32[512,192], index: 0, kind: input, shape index: {}]
  %s1 = inlined_call_operand.vmem [shape: bf16[192,256], index: 1, kind: input, shape index: {}]
  %s2 = inlined_call_operand.vmem [shape: bf16[256,256], index: 2, kind: input, shape index: {}]
  %s3 = inlined_call_operand.vmem [shape: bf16[256,128], index: 3, kind: input, shape index: {}]
  %s4 = inlined_call_operand.vmem [shape: f32[8,256], index: 4, kind: input, shape index: {}]
  %s5 = inlined_call_operand.vmem [shape: f32[128,128], index: 5, kind: input, shape index: {}]
  %s6 = inlined_call_operand.hbm [shape: f32[512,128], index: 6, kind: output, shape index: {}]
  %s7 = sld [smem:[#allocation0]]
  $region57: #{tpu_custom_call.1} parent=0
    _
  %s9 = ssub.s32 1, %s7
  %s10 = scalar_select 0, %s9, %s7
  $region1: #{tpu_custom_call.1} parent=0
    #allocation2 [shape = 'u8[131072]{0}', space=vmem, size = 0x20000, scoped, tag = 'output window, operand 0']
    #allocation3 [shape = 's32[2]{0}', space=sflag, size = 0x8, scoped, tag = 'scoped memory for tpu_custom_call.1']
    %11 = vsyncpa [#allocation3], 0
    %s12 = scalar_lea.sflag [#allocation3], 1
    %13 = vsyncpa %s12, 0
    loop: start=0, step=1, limit=6
    $region2: #{tpu_custom_call.1} parent=1 // loop_pre_header
      _
    $region3: #{tpu_custom_call.1} parent=1 // loop_header
      %s15 = sphi 0, %s19
      %p16 = scmp.ge.s32.totalorder %s15, 6
      %s25 = sphi 0, %s27
      %s28 = sphi 0, %s25
      %s29 = sphi 0, %s28
      %s45 = sphi 0, %s29
      %s49 = sphi 0, %s49
      %s51 = sphi 0, %s49
      %s52 = sphi 0, %s51
      %s66 = sphi 0, %s52
      %s70 = sphi 0, %s70
      %s72 = sphi 0, %s70
      %s73 = sphi 0, %s72
      %s87 = sphi 0, %s73
      %s91 = sphi 0, %s91
      %s93 = sphi 0, %s91
      %s94 = sphi 0, %s93
      %s108 = sphi 0, %s94
      %s112 = sphi 0, %s112
      %s114 = sphi 0, %s112
      %s115 = sphi 0, %s114
      %s129 = sphi 0, %s115
      %s133 = sphi 0, %s133
      %s135 = sphi 0, %s133
      %s136 = sphi 0, %s135
      %s150 = sphi 0, %s136
      %s156 = sphi 0, %s158
      %s159 = sphi 0, %s156
      %s160 = sphi 0, %s159
      %s176 = sphi 0, %s160
    $region4: #{tpu_custom_call.1} parent=1 // loop_header_branch
      %18 = sbr.rel (%p16) target = $region8
    $region5: #{tpu_custom_call.1} parent=1 // loop_body
      %s20 = ssub.s32 %s15, 1
      %s21 = ssub.s32 %s15, 2
      %s22 = sadd.s32 %s15, 1
      %s23 = ssub.s32 %s15, %s22
      %p24 = scmp.eq.s32.totalorder %s23, 0
      %s26 = sadd.s32 %s25, 1
      %s27 = scalar_select %p24, %s25, %s26
      %p30 = pneg %p24
      %p31 = scmp.eq.s32.totalorder %s15, 3
      %p32 = por %p30, %p31
      %p33 = scmp.ne.s32.totalorder %s25, %s28
      %p34 = scmp.eq.s32.totalorder %s15, 0
      %p35 = por %p33, %p34
      %p36 = scmp.ne.s32.totalorder %s25, %s28
      %p37 = scmp.eq.s32.totalorder %s20, 3
      %p38 = por %p36, %p37
      %p39 = scmp.ne.s32.totalorder %s28, %s29
      %p40 = scmp.eq.s32.totalorder %s20, 0
      %p41 = por %p39, %p40
      %p42 = scmp.ne.s32.totalorder %s28, %s29
      %p43 = scmp.eq.s32.totalorder %s21, 3
      %p44 = por %p42, %p43
      %p46 = scmp.ne.s32.totalorder %s29, %s45
      %p47 = scmp.eq.s32.totalorder %s21, 0
      %p48 = por %p46, %p47
      %s50 = sadd.s32 %s49, 1
      %p53 = scmp.eq.s32.totalorder %s15, 3
      %p54 = scmp.ne.s32.totalorder %s49, %s51
      %p55 = scmp.eq.s32.totalorder %s15, 0
      %p56 = por %p54, %p55
      %p57 = scmp.ne.s32.totalorder %s49, %s51
      %p58 = scmp.eq.s32.totalorder %s20, 3
      %p59 = por %p57, %p58
      %p60 = scmp.ne.s32.totalorder %s51, %s52
      %p61 = scmp.eq.s32.totalorder %s20, 0
      %p62 = por %p60, %p61
      %p63 = scmp.ne.s32.totalorder %s51, %s52
      %p64 = scmp.eq.s32.totalorder %s21, 3
      %p65 = por %p63, %p64
      %p67 = scmp.ne.s32.totalorder %s52, %s66
      %p68 = scmp.eq.s32.totalorder %s21, 0
      %p69 = por %p67, %p68
      %s71 = sadd.s32 %s70, 1
      %p74 = scmp.eq.s32.totalorder %s15, 3
      %p75 = scmp.ne.s32.totalorder %s70, %s72
      %p76 = scmp.eq.s32.totalorder %s15, 0
      %p77 = por %p75, %p76
      %p78 = scmp.ne.s32.totalorder %s70, %s72
      %p79 = scmp.eq.s32.totalorder %s20, 3
      %p80 = por %p78, %p79
      %p81 = scmp.ne.s32.totalorder %s72, %s73
      %p82 = scmp.eq.s32.totalorder %s20, 0
      %p83 = por %p81, %p82
      %p84 = scmp.ne.s32.totalorder %s72, %s73
      %p85 = scmp.eq.s32.totalorder %s21, 3
      %p86 = por %p84, %p85
      %p88 = scmp.ne.s32.totalorder %s73, %s87
      %p89 = scmp.eq.s32.totalorder %s21, 0
      %p90 = por %p88, %p89
      %s92 = sadd.s32 %s91, 1
      %p95 = scmp.eq.s32.totalorder %s15, 3
      %p96 = scmp.ne.s32.totalorder %s91, %s93
      %p97 = scmp.eq.s32.totalorder %s15, 0
      %p98 = por %p96, %p97
      %p99 = scmp.ne.s32.totalorder %s91, %s93
      %p100 = scmp.eq.s32.totalorder %s20, 3
      %p101 = por %p99, %p100
      %p102 = scmp.ne.s32.totalorder %s93, %s94
      %p103 = scmp.eq.s32.totalorder %s20, 0
      %p104 = por %p102, %p103
      %p105 = scmp.ne.s32.totalorder %s93, %s94
      %p106 = scmp.eq.s32.totalorder %s21, 3
      %p107 = por %p105, %p106
      %p109 = scmp.ne.s32.totalorder %s94, %s108
      %p110 = scmp.eq.s32.totalorder %s21, 0
      %p111 = por %p109, %p110
      %s113 = sadd.s32 %s112, 1
      %p116 = scmp.eq.s32.totalorder %s15, 3
      %p117 = scmp.ne.s32.totalorder %s112, %s114
      %p118 = scmp.eq.s32.totalorder %s15, 0
      %p119 = por %p117, %p118
      %p120 = scmp.ne.s32.totalorder %s112, %s114
      %p121 = scmp.eq.s32.totalorder %s20, 3
      %p122 = por %p120, %p121
      %p123 = scmp.ne.s32.totalorder %s114, %s115
      %p124 = scmp.eq.s32.totalorder %s20, 0
      %p125 = por %p123, %p124
      %p126 = scmp.ne.s32.totalorder %s114, %s115
      %p127 = scmp.eq.s32.totalorder %s21, 3
      %p128 = por %p126, %p127
      %p130 = scmp.ne.s32.totalorder %s115, %s129
      %p131 = scmp.eq.s32.totalorder %s21, 0
      %p132 = por %p130, %p131
      %s134 = sadd.s32 %s133, 1
      %p137 = scmp.eq.s32.totalorder %s15, 3
      %p138 = scmp.ne.s32.totalorder %s133, %s135
      %p139 = scmp.eq.s32.totalorder %s15, 0
      %p140 = por %p138, %p139
      %p141 = scmp.ne.s32.totalorder %s133, %s135
      %p142 = scmp.eq.s32.totalorder %s20, 3
      %p143 = por %p141, %p142
      %p144 = scmp.ne.s32.totalorder %s135, %s136
      %p145 = scmp.eq.s32.totalorder %s20, 0
      %p146 = por %p144, %p145
      %p147 = scmp.ne.s32.totalorder %s135, %s136
      %p148 = scmp.eq.s32.totalorder %s21, 3
      %p149 = por %p147, %p148
      %p151 = scmp.ne.s32.totalorder %s136, %s150
      %p152 = scmp.eq.s32.totalorder %s21, 0
      %p153 = por %p151, %p152
      %s154 = ssub.s32 %s15, %s22
      %p155 = scmp.eq.s32.totalorder %s154, 0
      %s157 = sadd.s32 %s156, 1
      %s158 = scalar_select %p155, %s156, %s157
      %p161 = pneg %p155
      %p162 = scmp.eq.s32.totalorder %s15, 3
      %p163 = por %p161, %p162
      %p164 = scmp.ne.s32.totalorder %s156, %s159
      %p165 = scmp.eq.s32.totalorder %s15, 0
      %p166 = por %p164, %p165
      %p167 = scmp.ne.s32.totalorder %s156, %s159
      %p168 = scmp.eq.s32.totalorder %s20, 3
      %p169 = por %p167, %p168
      %p170 = scmp.ne.s32.totalorder %s159, %s160
      %p171 = scmp.eq.s32.totalorder %s20, 0
      %p172 = por %p170, %p171
      %p173 = scmp.ne.s32.totalorder %s159, %s160
      %p174 = scmp.eq.s32.totalorder %s21, 3
      %p175 = por %p173, %p174
      %p177 = scmp.ne.s32.totalorder %s160, %s176
      %p178 = scmp.eq.s32.totalorder %s21, 0
      %p179 = por %p177, %p178
      %p180 = scmp.le.s32.totalorder 1, %s15
      %p181 = scmp.lt.s32.totalorder %s15, 5
      %p182 = pnand %p180, %p181
      %p183 = pneg %p182
      // Predicated region
      $region9: #{tpu_custom_call.1} parent=5 // pred_check
        _
      $region10: #{tpu_custom_call.1} parent=5 // pred_check_branch
        %185 = sbr.rel (%p182) target = $region12
      $region11: #{tpu_custom_call.1} parent=5 // pred_region
        %s186 = ssub.s32 %s15, 1
        // Predicated region
        $region13: #{tpu_custom_call.1} parent=11 // pred_check
          %p187 = pneg %p62
        $region14: #{tpu_custom_call.1} parent=11 // pred_check_branch
          %189 = sbr.rel (%p187) target = $region16
        $region15: #{tpu_custom_call.1} parent=11 // pred_region
          _
        $region16: #{tpu_custom_call.1} parent=11 // pred_fallthru
          _
        // Predicated region
        $region17: #{tpu_custom_call.1} parent=11 // pred_check
          %p190 = pneg %p83
        $region18: #{tpu_custom_call.1} parent=11 // pred_check_branch
          %192 = sbr.rel (%p190) target = $region20
        $region19: #{tpu_custom_call.1} parent=11 // pred_region
          _
        $region20: #{tpu_custom_call.1} parent=11 // pred_fallthru
          _
        // Predicated region
        $region21: #{tpu_custom_call.1} parent=11 // pred_check
          %p193 = pneg %p104
        $region22: #{tpu_custom_call.1} parent=11 // pred_check_branch
          %195 = sbr.rel (%p193) target = $region24
        $region23: #{tpu_custom_call.1} parent=11 // pred_region
          _
        $region24: #{tpu_custom_call.1} parent=11 // pred_fallthru
          _
        // Predicated region
        $region25: #{tpu_custom_call.1} parent=11 // pred_check
          %p196 = pneg %p125
        $region26: #{tpu_custom_call.1} parent=11 // pred_check_branch
          %198 = sbr.rel (%p196) target = $region28
        $region27: #{tpu_custom_call.1} parent=11 // pred_region
          _
        $region28: #{tpu_custom_call.1} parent=11 // pred_fallthru
          _
        // Predicated region
        $region29: #{tpu_custom_call.1} parent=11 // pred_check
          %p199 = pneg %p146
        $region30: #{tpu_custom_call.1} parent=11 // pred_check_branch
          %201 = sbr.rel (%p199) target = $region32
        $region31: #{tpu_custom_call.1} parent=11 // pred_region
          _
        $region32: #{tpu_custom_call.1} parent=11 // pred_fallthru
          _
      $region12: #{tpu_custom_call.1} parent=5 // pred_fallthru
        _
      %p202 = scmp.lt.s32.totalorder %s15, 4
      // Predicated region
      $region33: #{tpu_custom_call.1} parent=5 // pred_check
        %p203 = pneg %p202
      $region34: #{tpu_custom_call.1} parent=5 // pred_check_branch
        %205 = sbr.rel (%p203) target = $region36
      $region35: #{tpu_custom_call.1} parent=5 // pred_region
        // Predicated region
        $region37: #{tpu_custom_call.1} parent=35 // pred_check
          %p206 = pneg %p35
        $region38: #{tpu_custom_call.1} parent=35 // pred_check_branch
          %208 = sbr.rel (%p206) target = $region40
        $region39: #{tpu_custom_call.1} parent=35 // pred_region
          %s209 = smul.u32 16, %s15
          %p210 = scmp.lt.s32.totalorder %s209, 63
          %s211 = scalar_select %p210, %s209, 63
          %s212 = smul.addr %s211, 2
          %s213 = smul.addr %s212, 8
          %s214 = scalar_lea.vmem %s0, %s213
          %s215 = smul.u32 16, %s15
        $region40: #{tpu_custom_call.1} parent=35 // pred_fallthru
          _
      $region36: #{tpu_custom_call.1} parent=5 // pred_fallthru
        _
      %p216 = scmp.le.s32.totalorder 1, %s15
      %p217 = scmp.lt.s32.totalorder %s15, 5
      %p218 = pnand %p216, %p217
      %p219 = pneg %p218
      // Predicated region
      $region41: #{tpu_custom_call.1} parent=5 // pred_check
        _
      $region42: #{tpu_custom_call.1} parent=5 // pred_check_branch
        %221 = sbr.rel (%p218) target = $region44
      $region43: #{tpu_custom_call.1} parent=5 // pred_region
        %s222 = ssub.s32 %s15, 1
        %s223 = smul.u32 16, %s20
        %p224 = scmp.lt.s32.totalorder %s223, 63
        %s225 = scalar_select %p224, %s223, 63
        %s226 = smul.addr %s225, 2
        %s227 = smul.addr %s226, 8
        %s228 = scalar_lea.vmem %s0, %s227
        %p229 = pneg %p41
        %p230 = pneg %p38
        %p231 = pneg %p62
        %p232 = pneg %p59
        %p233 = pneg %p83
        %p234 = pneg %p80
        %p235 = pneg %p104
        %p236 = pneg %p101
        %p237 = pneg %p125
        %p238 = pneg %p122
        %p239 = pneg %p146
        %p240 = pneg %p143
        %p241 = pneg %p172
        %p242 = pneg %p169
        %s243 = sand.u32 %s159, 1
        %s244 = scalar_lea.sflag [#allocation3], %s243
        %s245 = sand.u32 %s159, 1
        %s246 = smul.addr %s245, 128
        %s247 = scalar_lea.vmem [#allocation2], %s246
        %s248 = smul.u32 16, %s20
        %p249 = scmp.lt.s32.totalorder %s248, 63
        %s250 = scalar_select %p249, %s248, 63
        %s251 = smul.addr %s250, 2
        %s252 = smul.addr %s251, 8
        %s253 = scalar_lea.vmem %s0, %s252
        %s254 = smul.u32 16, %s20
        %s255 = smul.u32 16, %s20
        %v257 = vld [vmem:[%s4] sm:$0xff]
        %v258 = vld [vmem:[%s4 + $0x8] sm:$0xff]
        %v259 = vld [vmem:[%s253] sm:$0xff]
        %v260 = vld [vmem:[%s253 + $0x8] sm:$0xff]
        %v261 = vld [vmem:[%s253 + $0x10] sm:$0xff]
        %v262 = vld [vmem:[%s253 + $0x18] sm:$0xff]
        %v263 = vld [vmem:[%s253 + $0x20] sm:$0xff]
        %v264 = vld [vmem:[%s253 + $0x28] sm:$0xff]
        %v265 = vld [vmem:[%s253 + $0x30] sm:$0xff]
        %v266 = vld [vmem:[%s253 + $0x38] sm:$0xff]
        %v267 = vld [vmem:[%s253 + $0x40] sm:$0xff]
        %v268 = vld [vmem:[%s253 + $0x48] sm:$0xff]
        %v269 = vld [vmem:[%s253 + $0x50] sm:$0xff]
        %v270 = vld [vmem:[%s253 + $0x58] sm:$0xff]
        %v271 = vld [vmem:[%s253 + $0x60] sm:$0xff]
        %v272 = vld [vmem:[%s253 + $0x68] sm:$0xff]
        %v273 = vld [vmem:[%s253 + $0x70] sm:$0xff]
        %v274 = vld [vmem:[%s253 + $0x78] sm:$0xff]
        %v275 = vld [vmem:[%s253 + $0x80] sm:$0xff]
        %v276 = vld [vmem:[%s253 + $0x88] sm:$0xff]
        %v277 = vld [vmem:[%s253 + $0x90] sm:$0xff]
        %v278 = vld [vmem:[%s253 + $0x98] sm:$0xff]
        %v279 = vld [vmem:[%s253 + $0xa0] sm:$0xff]
        %v280 = vld [vmem:[%s253 + $0xa8] sm:$0xff]
        %v281 = vld [vmem:[%s253 + $0xb0] sm:$0xff]
        %v282 = vld [vmem:[%s253 + $0xb8] sm:$0xff]
        %v283 = vld [vmem:[%s253 + $0xc0] sm:$0xff]
        %v284 = vld [vmem:[%s253 + $0xc8] sm:$0xff]
        %v285 = vld [vmem:[%s253 + $0xd0] sm:$0xff]
        %v286 = vld [vmem:[%s253 + $0xd8] sm:$0xff]
        %v287 = vld [vmem:[%s253 + $0xe0] sm:$0xff]
        %v288 = vld [vmem:[%s253 + $0xe8] sm:$0xff]
        %v289 = vld [vmem:[%s253 + $0xf0] sm:$0xff]
        %v290 = vld [vmem:[%s253 + $0xf8] sm:$0xff]
        %v291 = vld [vmem:[%s1] sm:$0xff]
        %v292 = vld [vmem:[%s1 + $0x8] sm:$0xff]
        %v293 = vld [vmem:[%s1 + $0x10] sm:$0xff]
        %v294 = vld [vmem:[%s1 + $0x18] sm:$0xff]
        %v295 = vld [vmem:[%s1 + $0x20] sm:$0xff]
        %v296 = vld [vmem:[%s1 + $0x28] sm:$0xff]
        %v297 = vld [vmem:[%s1 + $0x30] sm:$0xff]
        %v298 = vld [vmem:[%s1 + $0x38] sm:$0xff]
        %v299 = vld [vmem:[%s1 + $0x40] sm:$0xff]
        %v300 = vld [vmem:[%s1 + $0x48] sm:$0xff]
        %v301 = vld [vmem:[%s1 + $0x50] sm:$0xff]
        %v302 = vld [vmem:[%s1 + $0x58] sm:$0xff]
        %v303 = vld [vmem:[%s1 + $0x60] sm:$0xff]
        %v304 = vld [vmem:[%s1 + $0x68] sm:$0xff]
        %v305 = vld [vmem:[%s1 + $0x70] sm:$0xff]
        %v306 = vld [vmem:[%s1 + $0x78] sm:$0xff]
        %v307 = vld [vmem:[%s1 + $0x80] sm:$0xff]
        %v308 = vld [vmem:[%s1 + $0x88] sm:$0xff]
        %v309 = vld [vmem:[%s1 + $0x90] sm:$0xff]
        %v310 = vld [vmem:[%s1 + $0x98] sm:$0xff]
        %v311 = vld [vmem:[%s1 + $0xa0] sm:$0xff]
        %v312 = vld [vmem:[%s1 + $0xa8] sm:$0xff]
        %v313 = vld [vmem:[%s1 + $0xb0] sm:$0xff]
        %v314 = vld [vmem:[%s1 + $0xb8] sm:$0xff]
        %v315 = vld [vmem:[%s2] sm:$0xff]
        %v316 = vld [vmem:[%s2 + $0x8] sm:$0xff]
        %v317 = vld [vmem:[%s2 + $0x10] sm:$0xff]
        %v318 = vld [vmem:[%s2 + $0x18] sm:$0xff]
        %v319 = vld [vmem:[%s2 + $0x20] sm:$0xff]
        %v320 = vld [vmem:[%s2 + $0x28] sm:$0xff]
        %v321 = vld [vmem:[%s2 + $0x30] sm:$0xff]
        %v322 = vld [vmem:[%s2 + $0x38] sm:$0xff]
        %v323 = vld [vmem:[%s2 + $0x40] sm:$0xff]
        %v324 = vld [vmem:[%s2 + $0x48] sm:$0xff]
        %v325 = vld [vmem:[%s2 + $0x50] sm:$0xff]
        %v326 = vld [vmem:[%s2 + $0x58] sm:$0xff]
        %v327 = vld [vmem:[%s2 + $0x60] sm:$0xff]
        %v328 = vld [vmem:[%s2 + $0x68] sm:$0xff]
        %v329 = vld [vmem:[%s2 + $0x70] sm:$0xff]
        %v330 = vld [vmem:[%s2 + $0x78] sm:$0xff]
        %v331 = vld [vmem:[%s2 + $0x80] sm:$0xff]
        %v332 = vld [vmem:[%s2 + $0x88] sm:$0xff]
        %v333 = vld [vmem:[%s2 + $0x90] sm:$0xff]
        %v334 = vld [vmem:[%s2 + $0x98] sm:$0xff]
        %v335 = vld [vmem:[%s2 + $0xa0] sm:$0xff]
        %v336 = vld [vmem:[%s2 + $0xa8] sm:$0xff]
        %v337 = vld [vmem:[%s2 + $0xb0] sm:$0xff]
        %v338 = vld [vmem:[%s2 + $0xb8] sm:$0xff]
        %v339 = vld [vmem:[%s2 + $0xc0] sm:$0xff]
        %v340 = vld [vmem:[%s2 + $0xc8] sm:$0xff]
        %v341 = vld [vmem:[%s2 + $0xd0] sm:$0xff]
        %v342 = vld [vmem:[%s2 + $0xd8] sm:$0xff]
        %v343 = vld [vmem:[%s2 + $0xe0] sm:$0xff]
        %v344 = vld [vmem:[%s2 + $0xe8] sm:$0xff]
        %v345 = vld [vmem:[%s2 + $0xf0] sm:$0xff]
        %v346 = vld [vmem:[%s2 + $0xf8] sm:$0xff]
        %v347 = vld [vmem:[%s3] sm:$0xf]
        %v348 = vld [vmem:[%s3 + $0x4] sm:$0xf]
        %v349 = vld [vmem:[%s3 + $0x8] sm:$0xf]
        %v350 = vld [vmem:[%s3 + $0xc] sm:$0xf]
        %v351 = vld [vmem:[%s3 + $0x10] sm:$0xf]
        %v352 = vld [vmem:[%s3 + $0x14] sm:$0xf]
        %v353 = vld [vmem:[%s3 + $0x18] sm:$0xf]
        %v354 = vld [vmem:[%s3 + $0x1c] sm:$0xf]
        %v355 = vld [vmem:[%s3 + $0x20] sm:$0xf]
        %v356 = vld [vmem:[%s3 + $0x24] sm:$0xf]
        %v357 = vld [vmem:[%s3 + $0x28] sm:$0xf]
        %v358 = vld [vmem:[%s3 + $0x2c] sm:$0xf]
        %v359 = vld [vmem:[%s3 + $0x30] sm:$0xf]
        %v360 = vld [vmem:[%s3 + $0x34] sm:$0xf]
        %v361 = vld [vmem:[%s3 + $0x38] sm:$0xf]
        %v362 = vld [vmem:[%s3 + $0x3c] sm:$0xf]
        %v363 = vld [vmem:[%s3 + $0x40] sm:$0xf]
        %v364 = vld [vmem:[%s3 + $0x44] sm:$0xf]
        %v365 = vld [vmem:[%s3 + $0x48] sm:$0xf]
        %v366 = vld [vmem:[%s3 + $0x4c] sm:$0xf]
        %v367 = vld [vmem:[%s3 + $0x50] sm:$0xf]
        %v368 = vld [vmem:[%s3 + $0x54] sm:$0xf]
        %v369 = vld [vmem:[%s3 + $0x58] sm:$0xf]
        %v370 = vld [vmem:[%s3 + $0x5c] sm:$0xf]
        %v371 = vld [vmem:[%s3 + $0x60] sm:$0xf]
        %v372 = vld [vmem:[%s3 + $0x64] sm:$0xf]
        %v373 = vld [vmem:[%s3 + $0x68] sm:$0xf]
        %v374 = vld [vmem:[%s3 + $0x6c] sm:$0xf]
        %v375 = vld [vmem:[%s3 + $0x70] sm:$0xf]
        %v376 = vld [vmem:[%s3 + $0x74] sm:$0xf]
        %v377 = vld [vmem:[%s3 + $0x78] sm:$0xf]
        %v378 = vld [vmem:[%s3 + $0x7c] sm:$0xf]
        %v379 = vld [vmem:[%s5] sm:$0xff]
        %v380 = vld [vmem:[%s5 + $0x8] sm:$0xff]
        %v381 = vld [vmem:[%s5 + $0x10] sm:$0xff]
        %v382 = vld [vmem:[%s5 + $0x18] sm:$0xff]
        %v383 = vld [vmem:[%s5 + $0x20] sm:$0xff]
        %v384 = vld [vmem:[%s5 + $0x28] sm:$0xff]
        %v385 = vld [vmem:[%s5 + $0x30] sm:$0xff]
        %v386 = vld [vmem:[%s5 + $0x38] sm:$0xff]
        %v387 = vld [vmem:[%s5 + $0x40] sm:$0xff]
        %v388 = vld [vmem:[%s5 + $0x48] sm:$0xff]
        %v389 = vld [vmem:[%s5 + $0x50] sm:$0xff]
        %v390 = vld [vmem:[%s5 + $0x58] sm:$0xff]
        %v391 = vld [vmem:[%s5 + $0x60] sm:$0xff]
        %v392 = vld [vmem:[%s5 + $0x68] sm:$0xff]
        %v393 = vld [vmem:[%s5 + $0x70] sm:$0xff]
        %v394 = vld [vmem:[%s5 + $0x78] sm:$0xff]
        %v395 = vpack.c.bf16 %v261, %v259
        %v396 = vpack.c.bf16 %v262, %v260
        %v397 = vpack.c.bf16 %v265, %v263
        %v398 = vpack.c.bf16 %v266, %v264
        %v399 = vpack.c.bf16 %v269, %v267
        %v400 = vpack.c.bf16 %v270, %v268
        %v401 = vpack.c.bf16 %v273, %v271
        %v402 = vpack.c.bf16 %v274, %v272
        %v403 = vpack.c.bf16 %v277, %v275
        %v404 = vpack.c.bf16 %v278, %v276
        %v405 = vpack.c.bf16 %v281, %v279
        %v406 = vpack.c.bf16 %v282, %v280
        %v407 = vpack.c.bf16 %v285, %v283
        %v408 = vpack.c.bf16 %v286, %v284
        %v409 = vpack.c.bf16 %v289, %v287
        %v410 = vpack.c.bf16 %v290, %v288
        %v411 = vlaneseq
        %v412 = vshrl.u32 %v411, 7
        %v413 = vsub.s32 0, %v412
        %v414 = vrot.slane %v257, %v413
        %v415 = vlaneseq
        %v416 = vshrl.u32 %v415, 7
        %v417 = vsub.s32 0, %v416
        %v418 = vrot.slane %v258, %v417
        %v443 = vunpack.c.l.b16 %v291
        %v444 = vunpack.c.h.b16 %v291
        %v445 = vunpack.c.l.b16 %v292
        %v446 = vunpack.c.h.b16 %v292
        %v447 = vunpack.c.l.b16 %v293
        %v448 = vunpack.c.h.b16 %v293
        %v449 = vunpack.c.l.b16 %v294
        %v450 = vunpack.c.h.b16 %v294
        %v451 = vunpack.c.l.b16 %v295
        %v452 = vunpack.c.h.b16 %v295
        %v453 = vunpack.c.l.b16 %v296
        %v454 = vunpack.c.h.b16 %v296
        %v455 = vunpack.c.l.b16 %v297
        %v456 = vunpack.c.h.b16 %v297
        %v457 = vunpack.c.l.b16 %v298
        %v458 = vunpack.c.h.b16 %v298
        %v459 = vunpack.c.l.b16 %v299
        %v460 = vunpack.c.h.b16 %v299
        %v461 = vunpack.c.l.b16 %v300
        %v462 = vunpack.c.h.b16 %v300
        %v463 = vunpack.c.l.b16 %v301
        %v464 = vunpack.c.h.b16 %v301
        %v465 = vunpack.c.l.b16 %v302
        %v466 = vunpack.c.h.b16 %v302
        %v467 = vunpack.c.l.b16 %v303
        %v468 = vunpack.c.h.b16 %v303
        %v469 = vunpack.c.l.b16 %v304
        %v470 = vunpack.c.h.b16 %v304
        %v471 = vunpack.c.l.b16 %v305
        %v472 = vunpack.c.h.b16 %v305
        %v473 = vunpack.c.l.b16 %v306
        %v474 = vunpack.c.h.b16 %v306
        %v475 = vunpack.c.l.b16 %v307
        %v476 = vunpack.c.h.b16 %v307
        %v477 = vunpack.c.l.b16 %v308
        %v478 = vunpack.c.h.b16 %v308
        %v479 = vunpack.c.l.b16 %v309
        %v480 = vunpack.c.h.b16 %v309
        %v481 = vunpack.c.l.b16 %v310
        %v482 = vunpack.c.h.b16 %v310
        %v483 = vunpack.c.l.b16 %v311
        %v484 = vunpack.c.h.b16 %v311
        %v485 = vunpack.c.l.b16 %v312
        %v486 = vunpack.c.h.b16 %v312
        %v487 = vunpack.c.l.b16 %v313
        %v488 = vunpack.c.h.b16 %v313
        %v489 = vunpack.c.l.b16 %v314
        %v490 = vunpack.c.h.b16 %v314
        %v491 = vpack.c.b16 %v445, %v443
        %v492 = vpack.c.b16 %v446, %v444
        %v493 = vpack.c.b16 %v449, %v447
        %v494 = vpack.c.b16 %v450, %v448
        %v495 = vpack.c.b16 %v453, %v451
        %v496 = vpack.c.b16 %v454, %v452
        %v497 = vpack.c.b16 %v457, %v455
        %v498 = vpack.c.b16 %v458, %v456
        %v499 = vpack.c.b16 %v461, %v459
        %v500 = vpack.c.b16 %v462, %v460
        %v501 = vpack.c.b16 %v465, %v463
        %v502 = vpack.c.b16 %v466, %v464
        %v503 = vpack.c.b16 %v469, %v467
        %v504 = vpack.c.b16 %v470, %v468
        %v505 = vpack.c.b16 %v473, %v471
        %v506 = vpack.c.b16 %v474, %v472
        %v507 = vpack.c.b16 %v477, %v475
        %v508 = vpack.c.b16 %v478, %v476
        %v509 = vpack.c.b16 %v481, %v479
        %v510 = vpack.c.b16 %v482, %v480
        %v511 = vpack.c.b16 %v485, %v483
        %v512 = vpack.c.b16 %v486, %v484
        %v513 = vpack.c.b16 %v489, %v487
        %v514 = vpack.c.b16 %v490, %v488
        %vm539 = vcmask 523264
        %v541 = vsel %vm539, %v396, 0
        %v544 = vsel %vm539, %v398, 0
        %v547 = vsel %vm539, %v400, 0
        %v550 = vsel %vm539, %v402, 0
        %v553 = vsel %vm539, %v404, 0
        %v556 = vsel %vm539, %v406, 0
        %v559 = vsel %vm539, %v408, 0
        %v562 = vsel %vm539, %v410, 0
        %564 = vmatprep.subr.bf16.mxu0 %v506
        %565 = vmatpush1.bf16.msra.mxu0 %v505
        %566 = vmatprep.subr.bf16.mxu0 %v504
        %567 = vmatpush1.bf16.msra.mxu0 %v503
        %568 = vmatprep.subr.bf16.mxu0 %v502
        %569 = vmatpush1.bf16.msra.mxu0 %v501
        %570 = vmatprep.subr.bf16.mxu0 %v500
        %571 = vmatpush1.bf16.msra.mxu0 %v499
        %572 = vmatprep.subr.bf16.mxu0 %v498
        %573 = vmatpush1.bf16.msra.mxu0 %v497
        %574 = vmatprep.subr.bf16.mxu0 %v496
        %575 = vmatpush1.bf16.msra.mxu0 %v495
        %576 = vmatprep.subr.bf16.mxu0 %v494
        %577 = vmatpush1.bf16.msra.mxu0 %v493
        %578 = vmatprep.subr.bf16.mxu0 %v492
        %579 = vmatpush1.bf16.msra.mxu0 %v491
        %580 = vmatprep.subr.bf16.mxu0 0
        %581 = vmatpush2.bf16.msra.mxu0 0
        %582 = vmatprep.subr.bf16.mxu0 0
        %583 = vmatpush2.bf16.msra.mxu0 0
        %584 = vmatprep.subr.bf16.mxu0 0
        %585 = vmatpush2.bf16.msra.mxu0 0
        %586 = vmatprep.subr.bf16.mxu0 0
        %587 = vmatpush2.bf16.msra.mxu0 0
        %588 = vmatprep.subr.bf16.mxu0 %v514
        %589 = vmatpush2.bf16.msra.mxu0 %v513
        %590 = vmatprep.subr.bf16.mxu0 %v512
        %591 = vmatpush2.bf16.msra.mxu0 %v511
        %592 = vmatprep.subr.bf16.mxu0 %v510
        %593 = vmatpush2.bf16.msra.mxu0 %v509
        %594 = vmatprep.subr.bf16.mxu0 %v508
        %595 = vmatpush2.bf16.msra.mxu0 %v507
        %596 = vmatprep.mubr.bf16.mxu0 %v541
        %597 = vmatmul.mubr.bf16.gmra.mxu0 %v395
        %v598 = vpop.f32.mrf.mxu0
        %v599 = vadd.f32 %v414, %v598
        %v600 = vpop.f32.mrf.mxu0
        %v601 = vadd.f32 %v418, %v600
        %v602 = vpop.f32.mrf.mxu0
        %v603 = vadd.f32 %v414, %v602
        %v604 = vpop.f32.mrf.mxu0
        %v605 = vadd.f32 %v418, %v604
        %606 = vmatprep.mubr.bf16.mxu0 %v544
        %607 = vmatmul.mubr.bf16.gmra.mxu0 %v397
        %v608 = vpop.f32.mrf.mxu0
        %v609 = vadd.f32 %v414, %v608
        %v610 = vpop.f32.mrf.mxu0
        %v611 = vadd.f32 %v418, %v610
        %v612 = vpop.f32.mrf.mxu0
        %v613 = vadd.f32 %v414, %v612
        %v614 = vpop.f32.mrf.mxu0
        %v615 = vadd.f32 %v418, %v614
        %616 = vmatprep.mubr.bf16.mxu0 %v547
        %617 = vmatmul.mubr.bf16.gmra.mxu0 %v399
        %v618 = vpop.f32.mrf.mxu0
        %v619 = vadd.f32 %v414, %v618
        %v620 = vpop.f32.mrf.mxu0
        %v621 = vadd.f32 %v418, %v620
        %v622 = vpop.f32.mrf.mxu0
        %v623 = vadd.f32 %v414, %v622
        %v624 = vpop.f32.mrf.mxu0
        %v625 = vadd.f32 %v418, %v624
        %626 = vmatprep.mubr.bf16.mxu0 %v550
        %627 = vmatmul.mubr.bf16.gmra.mxu0 %v401
        %v628 = vpop.f32.mrf.mxu0
        %v629 = vadd.f32 %v414, %v628
        %v630 = vpop.f32.mrf.mxu0
        %v631 = vadd.f32 %v418, %v630
        %v632 = vpop.f32.mrf.mxu0
        %v633 = vadd.f32 %v414, %v632
        %v634 = vpop.f32.mrf.mxu0
        %v635 = vadd.f32 %v418, %v634
        %636 = vmatprep.mubr.bf16.mxu0 %v553
        %637 = vmatmul.mubr.bf16.gmra.mxu0 %v403
        %v638 = vpop.f32.mrf.mxu0
        %v639 = vadd.f32 %v414, %v638
        %v640 = vpop.f32.mrf.mxu0
        %v641 = vadd.f32 %v418, %v640
        %v642 = vpop.f32.mrf.mxu0
        %v643 = vadd.f32 %v414, %v642
        %v644 = vpop.f32.mrf.mxu0
        %v645 = vadd.f32 %v418, %v644
        %646 = vmatprep.mubr.bf16.mxu0 %v556
        %647 = vmatmul.mubr.bf16.gmra.mxu0 %v405
        %v648 = vpop.f32.mrf.mxu0
        %v649 = vadd.f32 %v414, %v648
        %v650 = vpop.f32.mrf.mxu0
        %v651 = vadd.f32 %v418, %v650
        %v652 = vpop.f32.mrf.mxu0
        %v653 = vadd.f32 %v414, %v652
        %v654 = vpop.f32.mrf.mxu0
        %v655 = vadd.f32 %v418, %v654
        %656 = vmatprep.mubr.bf16.mxu0 %v559
        %657 = vmatmul.mubr.bf16.gmra.mxu0 %v407
        %v658 = vpop.f32.mrf.mxu0
        %v659 = vadd.f32 %v414, %v658
        %v660 = vpop.f32.mrf.mxu0
        %v661 = vadd.f32 %v418, %v660
        %v662 = vpop.f32.mrf.mxu0
        %v663 = vadd.f32 %v414, %v662
        %v664 = vpop.f32.mrf.mxu0
        %v665 = vadd.f32 %v418, %v664
        %666 = vmatprep.mubr.bf16.mxu0 %v562
        %667 = vmatmul.mubr.bf16.gmra.mxu0 %v409
        %v668 = vpop.f32.mrf.mxu0
        %v669 = vadd.f32 %v414, %v668
        %v670 = vpop.f32.mrf.mxu0
        %v671 = vadd.f32 %v418, %v670
        %v672 = vpop.f32.mrf.mxu0
        %v673 = vadd.f32 %v414, %v672
        %v674 = vpop.f32.mrf.mxu0
        %v675 = vadd.f32 %v418, %v674
        %676 = vdwg.mxu0
        %v677 = vmul.f32 %v599, 0.5
        %v678 = vmul.f32 %v601, 0.5
        %v679 = vmul.f32 %v603, 0.5
        %v680 = vmul.f32 %v605, 0.5
        %v681 = vmul.f32 %v609, 0.5
        %v682 = vmul.f32 %v611, 0.5
        %v683 = vmul.f32 %v613, 0.5
        %v684 = vmul.f32 %v615, 0.5
        %v685 = vmul.f32 %v619, 0.5
        %v686 = vmul.f32 %v621, 0.5
        %v687 = vmul.f32 %v623, 0.5
        %v688 = vmul.f32 %v625, 0.5
        %v689 = vmul.f32 %v629, 0.5
        %v690 = vmul.f32 %v631, 0.5
        %v691 = vmul.f32 %v633, 0.5
        %v692 = vmul.f32 %v635, 0.5
        %v693 = vmul.f32 %v639, 0.5
        %v694 = vmul.f32 %v641, 0.5
        %v695 = vmul.f32 %v643, 0.5
        %v696 = vmul.f32 %v645, 0.5
        %v697 = vmul.f32 %v649, 0.5
        %v698 = vmul.f32 %v651, 0.5
        %v699 = vmul.f32 %v653, 0.5
        %v700 = vmul.f32 %v655, 0.5
        %v701 = vmul.f32 %v659, 0.5
        %v702 = vmul.f32 %v661, 0.5
        %v703 = vmul.f32 %v663, 0.5
        %v704 = vmul.f32 %v665, 0.5
        %v705 = vmul.f32 %v669, 0.5
        %v706 = vmul.f32 %v671, 0.5
        %v707 = vmul.f32 %v673, 0.5
        %v708 = vmul.f32 %v675, 0.5
        %v709 = vmul.f32 %v599, 0.70710677
        %v710 = vmul.f32 %v601, 0.70710677
        %v711 = vmul.f32 %v603, 0.70710677
        %v712 = vmul.f32 %v605, 0.70710677
        %v713 = vmul.f32 %v609, 0.70710677
        %v714 = vmul.f32 %v611, 0.70710677
        %v715 = vmul.f32 %v613, 0.70710677
        %v716 = vmul.f32 %v615, 0.70710677
        %v717 = vmul.f32 %v619, 0.70710677
        %v718 = vmul.f32 %v621, 0.70710677
        %v719 = vmul.f32 %v623, 0.70710677
        %v720 = vmul.f32 %v625, 0.70710677
        %v721 = vmul.f32 %v629, 0.70710677
        %v722 = vmul.f32 %v631, 0.70710677
        %v723 = vmul.f32 %v633, 0.70710677
        %v724 = vmul.f32 %v635, 0.70710677
        %v725 = vmul.f32 %v639, 0.70710677
        %v726 = vmul.f32 %v641, 0.70710677
        %v727 = vmul.f32 %v643, 0.70710677
        %v728 = vmul.f32 %v645, 0.70710677
        %v729 = vmul.f32 %v649, 0.70710677
        %v730 = vmul.f32 %v651, 0.70710677
        %v731 = vmul.f32 %v653, 0.70710677
        %v732 = vmul.f32 %v655, 0.70710677
        %v733 = vmul.f32 %v659, 0.70710677
        %v734 = vmul.f32 %v661, 0.70710677
        %v735 = vmul.f32 %v663, 0.70710677
        %v736 = vmul.f32 %v665, 0.70710677
        %v737 = vmul.f32 %v669, 0.70710677
        %v738 = vmul.f32 %v671, 0.70710677
        %v739 = vmul.f32 %v673, 0.70710677
        %v740 = vmul.f32 %v675, 0.70710677
        %v741 = verf.f32.pop %v709
        %v742 = verf.f32.pop %v710
        %v743 = verf.f32.pop %v711
        %v744 = verf.f32.pop %v712
        %v745 = verf.f32.pop %v713
        %v746 = verf.f32.pop %v714
        %v747 = verf.f32.pop %v715
        %v748 = verf.f32.pop %v716
        %v749 = verf.f32.pop %v717
        %v750 = verf.f32.pop %v718
        %v751 = verf.f32.pop %v719
        %v752 = verf.f32.pop %v720
        %v753 = verf.f32.pop %v721
        %v754 = verf.f32.pop %v722
        %v755 = verf.f32.pop %v723
        %v756 = verf.f32.pop %v724
        %v757 = verf.f32.pop %v725
        %v758 = verf.f32.pop %v726
        %v759 = verf.f32.pop %v727
        %v760 = verf.f32.pop %v728
        %v761 = verf.f32.pop %v729
        %v762 = verf.f32.pop %v730
        %v763 = verf.f32.pop %v731
        %v764 = verf.f32.pop %v732
        %v765 = verf.f32.pop %v733
        %v766 = verf.f32.pop %v734
        %v767 = verf.f32.pop %v735
        %v768 = verf.f32.pop %v736
        %v769 = verf.f32.pop %v737
        %v770 = verf.f32.pop %v738
        %v771 = verf.f32.pop %v739
        %v772 = verf.f32.pop %v740
        %v773 = vadd.f32 %v741, 1.0
        %v774 = vadd.f32 %v742, 1.0
        %v775 = vadd.f32 %v743, 1.0
        %v776 = vadd.f32 %v744, 1.0
        %v777 = vadd.f32 %v745, 1.0
        %v778 = vadd.f32 %v746, 1.0
        %v779 = vadd.f32 %v747, 1.0
        %v780 = vadd.f32 %v748, 1.0
        %v781 = vadd.f32 %v749, 1.0
        %v782 = vadd.f32 %v750, 1.0
        %v783 = vadd.f32 %v751, 1.0
        %v784 = vadd.f32 %v752, 1.0
        %v785 = vadd.f32 %v753, 1.0
        %v786 = vadd.f32 %v754, 1.0
        %v787 = vadd.f32 %v755, 1.0
        %v788 = vadd.f32 %v756, 1.0
        %v789 = vadd.f32 %v757, 1.0
        %v790 = vadd.f32 %v758, 1.0
        %v791 = vadd.f32 %v759, 1.0
        %v792 = vadd.f32 %v760, 1.0
        %v793 = vadd.f32 %v761, 1.0
        %v794 = vadd.f32 %v762, 1.0
        %v795 = vadd.f32 %v763, 1.0
        %v796 = vadd.f32 %v764, 1.0
        %v797 = vadd.f32 %v765, 1.0
        %v798 = vadd.f32 %v766, 1.0
        %v799 = vadd.f32 %v767, 1.0
        %v800 = vadd.f32 %v768, 1.0
        %v801 = vadd.f32 %v769, 1.0
        %v802 = vadd.f32 %v770, 1.0
        %v803 = vadd.f32 %v771, 1.0
        %v804 = vadd.f32 %v772, 1.0
        %v805 = vmul.f32 %v677, %v773
        %v806 = vmul.f32 %v678, %v774
        %v807 = vmul.f32 %v679, %v775
        %v808 = vmul.f32 %v680, %v776
        %v809 = vmul.f32 %v681, %v777
        %v810 = vmul.f32 %v682, %v778
        %v811 = vmul.f32 %v683, %v779
        %v812 = vmul.f32 %v684, %v780
        %v813 = vmul.f32 %v685, %v781
        %v814 = vmul.f32 %v686, %v782
        %v815 = vmul.f32 %v687, %v783
        %v816 = vmul.f32 %v688, %v784
        %v817 = vmul.f32 %v689, %v785
        %v818 = vmul.f32 %v690, %v786
        %v819 = vmul.f32 %v691, %v787
        %v820 = vmul.f32 %v692, %v788
        %v821 = vmul.f32 %v693, %v789
        %v822 = vmul.f32 %v694, %v790
        %v823 = vmul.f32 %v695, %v791
        %v824 = vmul.f32 %v696, %v792
        %v825 = vmul.f32 %v697, %v793
        %v826 = vmul.f32 %v698, %v794
        %v827 = vmul.f32 %v699, %v795
        %v828 = vmul.f32 %v700, %v796
        %v829 = vmul.f32 %v701, %v797
        %v830 = vmul.f32 %v702, %v798
        %v831 = vmul.f32 %v703, %v799
        %v832 = vmul.f32 %v704, %v800
        %v833 = vmul.f32 %v705, %v801
        %v834 = vmul.f32 %v706, %v802
        %v835 = vmul.f32 %v707, %v803
        %v836 = vmul.f32 %v708, %v804
        %v837 = vpack.c.bf16 %v807, %v805
        %v838 = vpack.c.bf16 %v808, %v806
        %v839 = vpack.c.bf16 %v811, %v809
        %v840 = vpack.c.bf16 %v812, %v810
        %v841 = vpack.c.bf16 %v815, %v813
        %v842 = vpack.c.bf16 %v816, %v814
        %v843 = vpack.c.bf16 %v819, %v817
        %v844 = vpack.c.bf16 %v820, %v818
        %v845 = vpack.c.bf16 %v823, %v821
        %v846 = vpack.c.bf16 %v824, %v822
        %v847 = vpack.c.bf16 %v827, %v825
        %v848 = vpack.c.bf16 %v828, %v826
        %v849 = vpack.c.bf16 %v831, %v829
        %v850 = vpack.c.bf16 %v832, %v830
        %v851 = vpack.c.bf16 %v835, %v833
        %v852 = vpack.c.bf16 %v836, %v834
        %v853 = vlaneseq
        %v854 = vshrl.u32 %v853, 7
        %v855 = vsub.s32 1, %v854
        %v856 = vrot.slane %v257, %v855
        %v857 = vlaneseq
        %v858 = vshrl.u32 %v857, 7
        %v859 = vsub.s32 1, %v858
        %v860 = vrot.slane %v258, %v859
        %v893 = vunpack.c.l.b16 %v315
        %v894 = vunpack.c.h.b16 %v315
        %v895 = vunpack.c.l.b16 %v316
        %v896 = vunpack.c.h.b16 %v316
        %v897 = vunpack.c.l.b16 %v317
        %v898 = vunpack.c.h.b16 %v317
        %v899 = vunpack.c.l.b16 %v318
        %v900 = vunpack.c.h.b16 %v318
        %v901 = vunpack.c.l.b16 %v319
        %v902 = vunpack.c.h.b16 %v319
        %v903 = vunpack.c.l.b16 %v320
        %v904 = vunpack.c.h.b16 %v320
        %v905 = vunpack.c.l.b16 %v321
        %v906 = vunpack.c.h.b16 %v321
        %v907 = vunpack.c.l.b16 %v322
        %v908 = vunpack.c.h.b16 %v322
        %v909 = vunpack.c.l.b16 %v323
        %v910 = vunpack.c.h.b16 %v323
        %v911 = vunpack.c.l.b16 %v324
        %v912 = vunpack.c.h.b16 %v324
        %v913 = vunpack.c.l.b16 %v325
        %v914 = vunpack.c.h.b16 %v325
        %v915 = vunpack.c.l.b16 %v326
        %v916 = vunpack.c.h.b16 %v326
        %v917 = vunpack.c.l.b16 %v327
        %v918 = vunpack.c.h.b16 %v327
        %v919 = vunpack.c.l.b16 %v328
        %v920 = vunpack.c.h.b16 %v328
        %v921 = vunpack.c.l.b16 %v329
        %v922 = vunpack.c.h.b16 %v329
        %v923 = vunpack.c.l.b16 %v330
        %v924 = vunpack.c.h.b16 %v330
        %v925 = vunpack.c.l.b16 %v331
        %v926 = vunpack.c.h.b16 %v331
        %v927 = vunpack.c.l.b16 %v332
        %v928 = vunpack.c.h.b16 %v332
        %v929 = vunpack.c.l.b16 %v333
        %v930 = vunpack.c.h.b16 %v333
        %v931 = vunpack.c.l.b16 %v334
        %v932 = vunpack.c.h.b16 %v334
        %v933 = vunpack.c.l.b16 %v335
        %v934 = vunpack.c.h.b16 %v335
        %v935 = vunpack.c.l.b16 %v336
        %v936 = vunpack.c.h.b16 %v336
        %v937 = vunpack.c.l.b16 %v337
        %v938 = vunpack.c.h.b16 %v337
        %v939 = vunpack.c.l.b16 %v338
        %v940 = vunpack.c.h.b16 %v338
        %v941 = vunpack.c.l.b16 %v339
        %v942 = vunpack.c.h.b16 %v339
        %v943 = vunpack.c.l.b16 %v340
        %v944 = vunpack.c.h.b16 %v340
        %v945 = vunpack.c.l.b16 %v341
        %v946 = vunpack.c.h.b16 %v341
        %v947 = vunpack.c.l.b16 %v342
        %v948 = vunpack.c.h.b16 %v342
        %v949 = vunpack.c.l.b16 %v343
        %v950 = vunpack.c.h.b16 %v343
        %v951 = vunpack.c.l.b16 %v344
        %v952 = vunpack.c.h.b16 %v344
        %v953 = vunpack.c.l.b16 %v345
        %v954 = vunpack.c.h.b16 %v345
        %v955 = vunpack.c.l.b16 %v346
        %v956 = vunpack.c.h.b16 %v346
        %v957 = vpack.c.b16 %v895, %v893
        %v958 = vpack.c.b16 %v896, %v894
        %v959 = vpack.c.b16 %v899, %v897
        %v960 = vpack.c.b16 %v900, %v898
        %v961 = vpack.c.b16 %v903, %v901
        %v962 = vpack.c.b16 %v904, %v902
        %v963 = vpack.c.b16 %v907, %v905
        %v964 = vpack.c.b16 %v908, %v906
        %v965 = vpack.c.b16 %v911, %v909
        %v966 = vpack.c.b16 %v912, %v910
        %v967 = vpack.c.b16 %v915, %v913
        %v968 = vpack.c.b16 %v916, %v914
        %v969 = vpack.c.b16 %v919, %v917
        %v970 = vpack.c.b16 %v920, %v918
        %v971 = vpack.c.b16 %v923, %v921
        %v972 = vpack.c.b16 %v924, %v922
        %v973 = vpack.c.b16 %v927, %v925
        %v974 = vpack.c.b16 %v928, %v926
        %v975 = vpack.c.b16 %v931, %v929
        %v976 = vpack.c.b16 %v932, %v930
        %v977 = vpack.c.b16 %v935, %v933
        %v978 = vpack.c.b16 %v936, %v934
        %v979 = vpack.c.b16 %v939, %v937
        %v980 = vpack.c.b16 %v940, %v938
        %v981 = vpack.c.b16 %v943, %v941
        %v982 = vpack.c.b16 %v944, %v942
        %v983 = vpack.c.b16 %v947, %v945
        %v984 = vpack.c.b16 %v948, %v946
        %v985 = vpack.c.b16 %v951, %v949
        %v986 = vpack.c.b16 %v952, %v950
        %v987 = vpack.c.b16 %v955, %v953
        %v988 = vpack.c.b16 %v956, %v954
        %1021 = vmatprep.subr.bf16.mxu0 %v972
        %1022 = vmatpush1.bf16.msra.mxu0 %v971
        %1023 = vmatprep.subr.bf16.mxu0 %v970
        %1024 = vmatpush1.bf16.msra.mxu0 %v969
        %1025 = vmatprep.subr.bf16.mxu0 %v968
        %1026 = vmatpush1.bf16.msra.mxu0 %v967
        %1027 = vmatprep.subr.bf16.mxu0 %v966
        %1028 = vmatpush1.bf16.msra.mxu0 %v965
        %1029 = vmatprep.subr.bf16.mxu0 %v964
        %1030 = vmatpush1.bf16.msra.mxu0 %v963
        %1031 = vmatprep.subr.bf16.mxu0 %v962
        %1032 = vmatpush1.bf16.msra.mxu0 %v961
        %1033 = vmatprep.subr.bf16.mxu0 %v960
        %1034 = vmatpush1.bf16.msra.mxu0 %v959
        %1035 = vmatprep.subr.bf16.mxu0 %v958
        %1036 = vmatpush1.bf16.msra.mxu0 %v957
        %1037 = vmatprep.subr.bf16.mxu0 %v988
        %1038 = vmatpush2.bf16.msra.mxu0 %v987
        %1039 = vmatprep.subr.bf16.mxu0 %v986
        %1040 = vmatpush2.bf16.msra.mxu0 %v985
        %1041 = vmatprep.subr.bf16.mxu0 %v984
        %1042 = vmatpush2.bf16.msra.mxu0 %v983
        %1043 = vmatprep.subr.bf16.mxu0 %v982
        %1044 = vmatpush2.bf16.msra.mxu0 %v981
        %1045 = vmatprep.subr.bf16.mxu0 %v980
        %1046 = vmatpush2.bf16.msra.mxu0 %v979
        %1047 = vmatprep.subr.bf16.mxu0 %v978
        %1048 = vmatpush2.bf16.msra.mxu0 %v977
        %1049 = vmatprep.subr.bf16.mxu0 %v976
        %1050 = vmatpush2.bf16.msra.mxu0 %v975
        %1051 = vmatprep.subr.bf16.mxu0 %v974
        %1052 = vmatpush2.bf16.msra.mxu0 %v973
        %1053 = vmatprep.mubr.bf16.mxu0 %v838
        %1054 = vmatmul.mubr.bf16.gmra.mxu0 %v837
        %v1055 = vpop.f32.mrf.mxu0
        %v1056 = vadd.f32 %v856, %v1055
        %v1057 = vpop.f32.mrf.mxu0
        %v1058 = vadd.f32 %v860, %v1057
        %v1059 = vpop.f32.mrf.mxu0
        %v1060 = vadd.f32 %v856, %v1059
        %v1061 = vpop.f32.mrf.mxu0
        %v1062 = vadd.f32 %v860, %v1061
        %1063 = vmatprep.mubr.bf16.mxu0 %v840
        %1064 = vmatmul.mubr.bf16.gmra.mxu0 %v839
        %v1065 = vpop.f32.mrf.mxu0
        %v1066 = vadd.f32 %v856, %v1065
        %v1067 = vpop.f32.mrf.mxu0
        %v1068 = vadd.f32 %v860, %v1067
        %v1069 = vpop.f32.mrf.mxu0
        %v1070 = vadd.f32 %v856, %v1069
        %v1071 = vpop.f32.mrf.mxu0
        %v1072 = vadd.f32 %v860, %v1071
        %1073 = vmatprep.mubr.bf16.mxu0 %v842
        %1074 = vmatmul.mubr.bf16.gmra.mxu0 %v841
        %v1075 = vpop.f32.mrf.mxu0
        %v1076 = vadd.f32 %v856, %v1075
        %v1077 = vpop.f32.mrf.mxu0
        %v1078 = vadd.f32 %v860, %v1077
        %v1079 = vpop.f32.mrf.mxu0
        %v1080 = vadd.f32 %v856, %v1079
        %v1081 = vpop.f32.mrf.mxu0
        %v1082 = vadd.f32 %v860, %v1081
        %1083 = vmatprep.mubr.bf16.mxu0 %v844
        %1084 = vmatmul.mubr.bf16.gmra.mxu0 %v843
        %v1085 = vpop.f32.mrf.mxu0
        %v1086 = vadd.f32 %v856, %v1085
        %v1087 = vpop.f32.mrf.mxu0
        %v1088 = vadd.f32 %v860, %v1087
        %v1089 = vpop.f32.mrf.mxu0
        %v1090 = vadd.f32 %v856, %v1089
        %v1091 = vpop.f32.mrf.mxu0
        %v1092 = vadd.f32 %v860, %v1091
        %1093 = vmatprep.mubr.bf16.mxu0 %v846
        %1094 = vmatmul.mubr.bf16.gmra.mxu0 %v845
        %v1095 = vpop.f32.mrf.mxu0
        %v1096 = vadd.f32 %v856, %v1095
        %v1097 = vpop.f32.mrf.mxu0
        %v1098 = vadd.f32 %v860, %v1097
        %v1099 = vpop.f32.mrf.mxu0
        %v1100 = vadd.f32 %v856, %v1099
        %v1101 = vpop.f32.mrf.mxu0
        %v1102 = vadd.f32 %v860, %v1101
        %1103 = vmatprep.mubr.bf16.mxu0 %v848
        %1104 = vmatmul.mubr.bf16.gmra.mxu0 %v847
        %v1105 = vpop.f32.mrf.mxu0
        %v1106 = vadd.f32 %v856, %v1105
        %v1107 = vpop.f32.mrf.mxu0
        %v1108 = vadd.f32 %v860, %v1107
        %v1109 = vpop.f32.mrf.mxu0
        %v1110 = vadd.f32 %v856, %v1109
        %v1111 = vpop.f32.mrf.mxu0
        %v1112 = vadd.f32 %v860, %v1111
        %1113 = vmatprep.mubr.bf16.mxu0 %v850
        %1114 = vmatmul.mubr.bf16.gmra.mxu0 %v849
        %v1115 = vpop.f32.mrf.mxu0
        %v1116 = vadd.f32 %v856, %v1115
        %v1117 = vpop.f32.mrf.mxu0
        %v1118 = vadd.f32 %v860, %v1117
        %v1119 = vpop.f32.mrf.mxu0
        %v1120 = vadd.f32 %v856, %v1119
        %v1121 = vpop.f32.mrf.mxu0
        %v1122 = vadd.f32 %v860, %v1121
        %1123 = vmatprep.mubr.bf16.mxu0 %v852
        %1124 = vmatmul.mubr.bf16.gmra.mxu0 %v851
        %v1125 = vpop.f32.mrf.mxu0
        %v1126 = vadd.f32 %v856, %v1125
        %v1127 = vpop.f32.mrf.mxu0
        %v1128 = vadd.f32 %v860, %v1127
        %v1129 = vpop.f32.mrf.mxu0
        %v1130 = vadd.f32 %v856, %v1129
        %v1131 = vpop.f32.mrf.mxu0
        %v1132 = vadd.f32 %v860, %v1131
        %1133 = vdwg.mxu0
        %v1134 = vmul.f32 %v1056, 0.5
        %v1135 = vmul.f32 %v1058, 0.5
        %v1136 = vmul.f32 %v1060, 0.5
        %v1137 = vmul.f32 %v1062, 0.5
        %v1138 = vmul.f32 %v1066, 0.5
        %v1139 = vmul.f32 %v1068, 0.5
        %v1140 = vmul.f32 %v1070, 0.5
        %v1141 = vmul.f32 %v1072, 0.5
        %v1142 = vmul.f32 %v1076, 0.5
        %v1143 = vmul.f32 %v1078, 0.5
        %v1144 = vmul.f32 %v1080, 0.5
        %v1145 = vmul.f32 %v1082, 0.5
        %v1146 = vmul.f32 %v1086, 0.5
        %v1147 = vmul.f32 %v1088, 0.5
        %v1148 = vmul.f32 %v1090, 0.5
        %v1149 = vmul.f32 %v1092, 0.5
        %v1150 = vmul.f32 %v1096, 0.5
        %v1151 = vmul.f32 %v1098, 0.5
        %v1152 = vmul.f32 %v1100, 0.5
        %v1153 = vmul.f32 %v1102, 0.5
        %v1154 = vmul.f32 %v1106, 0.5
        %v1155 = vmul.f32 %v1108, 0.5
        %v1156 = vmul.f32 %v1110, 0.5
        %v1157 = vmul.f32 %v1112, 0.5
        %v1158 = vmul.f32 %v1116, 0.5
        %v1159 = vmul.f32 %v1118, 0.5
        %v1160 = vmul.f32 %v1120, 0.5
        %v1161 = vmul.f32 %v1122, 0.5
        %v1162 = vmul.f32 %v1126, 0.5
        %v1163 = vmul.f32 %v1128, 0.5
        %v1164 = vmul.f32 %v1130, 0.5
        %v1165 = vmul.f32 %v1132, 0.5
        %v1166 = vmul.f32 %v1056, 0.70710677
        %v1167 = vmul.f32 %v1058, 0.70710677
        %v1168 = vmul.f32 %v1060, 0.70710677
        %v1169 = vmul.f32 %v1062, 0.70710677
        %v1170 = vmul.f32 %v1066, 0.70710677
        %v1171 = vmul.f32 %v1068, 0.70710677
        %v1172 = vmul.f32 %v1070, 0.70710677
        %v1173 = vmul.f32 %v1072, 0.70710677
        %v1174 = vmul.f32 %v1076, 0.70710677
        %v1175 = vmul.f32 %v1078, 0.70710677
        %v1176 = vmul.f32 %v1080, 0.70710677
        %v1177 = vmul.f32 %v1082, 0.70710677
        %v1178 = vmul.f32 %v1086, 0.70710677
        %v1179 = vmul.f32 %v1088, 0.70710677
        %v1180 = vmul.f32 %v1090, 0.70710677
        %v1181 = vmul.f32 %v1092, 0.70710677
        %v1182 = vmul.f32 %v1096, 0.70710677
        %v1183 = vmul.f32 %v1098, 0.70710677
        %v1184 = vmul.f32 %v1100, 0.70710677
        %v1185 = vmul.f32 %v1102, 0.70710677
        %v1186 = vmul.f32 %v1106, 0.70710677
        %v1187 = vmul.f32 %v1108, 0.70710677
        %v1188 = vmul.f32 %v1110, 0.70710677
        %v1189 = vmul.f32 %v1112, 0.70710677
        %v1190 = vmul.f32 %v1116, 0.70710677
        %v1191 = vmul.f32 %v1118, 0.70710677
        %v1192 = vmul.f32 %v1120, 0.70710677
        %v1193 = vmul.f32 %v1122, 0.70710677
        %v1194 = vmul.f32 %v1126, 0.70710677
        %v1195 = vmul.f32 %v1128, 0.70710677
        %v1196 = vmul.f32 %v1130, 0.70710677
        %v1197 = vmul.f32 %v1132, 0.70710677
        %v1198 = verf.f32.pop %v1166
        %v1199 = verf.f32.pop %v1167
        %v1200 = verf.f32.pop %v1168
        %v1201 = verf.f32.pop %v1169
        %v1202 = verf.f32.pop %v1170
        %v1203 = verf.f32.pop %v1171
        %v1204 = verf.f32.pop %v1172
        %v1205 = verf.f32.pop %v1173
        %v1206 = verf.f32.pop %v1174
        %v1207 = verf.f32.pop %v1175
        %v1208 = verf.f32.pop %v1176
        %v1209 = verf.f32.pop %v1177
        %v1210 = verf.f32.pop %v1178
        %v1211 = verf.f32.pop %v1179
        %v1212 = verf.f32.pop %v1180
        %v1213 = verf.f32.pop %v1181
        %v1214 = verf.f32.pop %v1182
        %v1215 = verf.f32.pop %v1183
        %v1216 = verf.f32.pop %v1184
        %v1217 = verf.f32.pop %v1185
        %v1218 = verf.f32.pop %v1186
        %v1219 = verf.f32.pop %v1187
        %v1220 = verf.f32.pop %v1188
        %v1221 = verf.f32.pop %v1189
        %v1222 = verf.f32.pop %v1190
        %v1223 = verf.f32.pop %v1191
        %v1224 = verf.f32.pop %v1192
        %v1225 = verf.f32.pop %v1193
        %v1226 = verf.f32.pop %v1194
        %v1227 = verf.f32.pop %v1195
        %v1228 = verf.f32.pop %v1196
        %v1229 = verf.f32.pop %v1197
        %v1230 = vadd.f32 %v1198, 1.0
        %v1231 = vadd.f32 %v1199, 1.0
        %v1232 = vadd.f32 %v1200, 1.0
        %v1233 = vadd.f32 %v1201, 1.0
        %v1234 = vadd.f32 %v1202, 1.0
        %v1235 = vadd.f32 %v1203, 1.0
        %v1236 = vadd.f32 %v1204, 1.0
        %v1237 = vadd.f32 %v1205, 1.0
        %v1238 = vadd.f32 %v1206, 1.0
        %v1239 = vadd.f32 %v1207, 1.0
        %v1240 = vadd.f32 %v1208, 1.0
        %v1241 = vadd.f32 %v1209, 1.0
        %v1242 = vadd.f32 %v1210, 1.0
        %v1243 = vadd.f32 %v1211, 1.0
        %v1244 = vadd.f32 %v1212, 1.0
        %v1245 = vadd.f32 %v1213, 1.0
        %v1246 = vadd.f32 %v1214, 1.0
        %v1247 = vadd.f32 %v1215, 1.0
        %v1248 = vadd.f32 %v1216, 1.0
        %v1249 = vadd.f32 %v1217, 1.0
        %v1250 = vadd.f32 %v1218, 1.0
        %v1251 = vadd.f32 %v1219, 1.0
        %v1252 = vadd.f32 %v1220, 1.0
        %v1253 = vadd.f32 %v1221, 1.0
        %v1254 = vadd.f32 %v1222, 1.0
        %v1255 = vadd.f32 %v1223, 1.0
        %v1256 = vadd.f32 %v1224, 1.0
        %v1257 = vadd.f32 %v1225, 1.0
        %v1258 = vadd.f32 %v1226, 1.0
        %v1259 = vadd.f32 %v1227, 1.0
        %v1260 = vadd.f32 %v1228, 1.0
        %v1261 = vadd.f32 %v1229, 1.0
        %v1262 = vmul.f32 %v1134, %v1230
        %v1263 = vmul.f32 %v1135, %v1231
        %v1264 = vmul.f32 %v1136, %v1232
        %v1265 = vmul.f32 %v1137, %v1233
        %v1266 = vmul.f32 %v1138, %v1234
        %v1267 = vmul.f32 %v1139, %v1235
        %v1268 = vmul.f32 %v1140, %v1236
        %v1269 = vmul.f32 %v1141, %v1237
        %v1270 = vmul.f32 %v1142, %v1238
        %v1271 = vmul.f32 %v1143, %v1239
        %v1272 = vmul.f32 %v1144, %v1240
        %v1273 = vmul.f32 %v1145, %v1241
        %v1274 = vmul.f32 %v1146, %v1242
        %v1275 = vmul.f32 %v1147, %v1243
        %v1276 = vmul.f32 %v1148, %v1244
        %v1277 = vmul.f32 %v1149, %v1245
        %v1278 = vmul.f32 %v1150, %v1246
        %v1279 = vmul.f32 %v1151, %v1247
        %v1280 = vmul.f32 %v1152, %v1248
        %v1281 = vmul.f32 %v1153, %v1249
        %v1282 = vmul.f32 %v1154, %v1250
        %v1283 = vmul.f32 %v1155, %v1251
        %v1284 = vmul.f32 %v1156, %v1252
        %v1285 = vmul.f32 %v1157, %v1253
        %v1286 = vmul.f32 %v1158, %v1254
        %v1287 = vmul.f32 %v1159, %v1255
        %v1288 = vmul.f32 %v1160, %v1256
        %v1289 = vmul.f32 %v1161, %v1257
        %v1290 = vmul.f32 %v1162, %v1258
        %v1291 = vmul.f32 %v1163, %v1259
        %v1292 = vmul.f32 %v1164, %v1260
        %v1293 = vmul.f32 %v1165, %v1261
        %v1294 = vpack.c.bf16 %v1264, %v1262
        %v1295 = vpack.c.bf16 %v1265, %v1263
        %v1296 = vpack.c.bf16 %v1268, %v1266
        %v1297 = vpack.c.bf16 %v1269, %v1267
        %v1298 = vpack.c.bf16 %v1272, %v1270
        %v1299 = vpack.c.bf16 %v1273, %v1271
        %v1300 = vpack.c.bf16 %v1276, %v1274
        %v1301 = vpack.c.bf16 %v1277, %v1275
        %v1302 = vpack.c.bf16 %v1280, %v1278
        %v1303 = vpack.c.bf16 %v1281, %v1279
        %v1304 = vpack.c.bf16 %v1284, %v1282
        %v1305 = vpack.c.bf16 %v1285, %v1283
        %v1306 = vpack.c.bf16 %v1288, %v1286
        %v1307 = vpack.c.bf16 %v1289, %v1287
        %v1308 = vpack.c.bf16 %v1292, %v1290
        %v1309 = vpack.c.bf16 %v1293, %v1291
        %v1310 = vlaneseq
        %v1311 = vshrl.u32 %v1310, 7
        %v1312 = vsub.s32 2, %v1311
        %v1313 = vrot.slane %v257, %v1312
        %v1346 = vunpack.c.l.b16 %v347
        %v1347 = vunpack.c.l.b16 %v348
        %v1348 = vunpack.c.l.b16 %v349
        %v1349 = vunpack.c.l.b16 %v350
        %v1350 = vunpack.c.l.b16 %v351
        %v1351 = vunpack.c.l.b16 %v352
        %v1352 = vunpack.c.l.b16 %v353
        %v1353 = vunpack.c.l.b16 %v354
        %v1354 = vunpack.c.l.b16 %v355
        %v1355 = vunpack.c.l.b16 %v356
        %v1356 = vunpack.c.l.b16 %v357
        %v1357 = vunpack.c.l.b16 %v358
        %v1358 = vunpack.c.l.b16 %v359
        %v1359 = vunpack.c.l.b16 %v360
        %v1360 = vunpack.c.l.b16 %v361
        %v1361 = vunpack.c.l.b16 %v362
        %v1362 = vunpack.c.l.b16 %v363
        %v1363 = vunpack.c.l.b16 %v364
        %v1364 = vunpack.c.l.b16 %v365
        %v1365 = vunpack.c.l.b16 %v366
        %v1366 = vunpack.c.l.b16 %v367
        %v1367 = vunpack.c.l.b16 %v368
        %v1368 = vunpack.c.l.b16 %v369
        %v1369 = vunpack.c.l.b16 %v370
        %v1370 = vunpack.c.l.b16 %v371
        %v1371 = vunpack.c.l.b16 %v372
        %v1372 = vunpack.c.l.b16 %v373
        %v1373 = vunpack.c.l.b16 %v374
        %v1374 = vunpack.c.l.b16 %v375
        %v1375 = vunpack.c.l.b16 %v376
        %v1376 = vunpack.c.l.b16 %v377
        %v1377 = vunpack.c.l.b16 %v378
        %v1378 = vpack.c.b16 %v1347, %v1346
        %v1379 = vpack.c.b16 %v1349, %v1348
        %v1380 = vpack.c.b16 %v1351, %v1350
        %v1381 = vpack.c.b16 %v1353, %v1352
        %v1382 = vpack.c.b16 %v1355, %v1354
        %v1383 = vpack.c.b16 %v1357, %v1356
        %v1384 = vpack.c.b16 %v1359, %v1358
        %v1385 = vpack.c.b16 %v1361, %v1360
        %v1386 = vpack.c.b16 %v1363, %v1362
        %v1387 = vpack.c.b16 %v1365, %v1364
        %v1388 = vpack.c.b16 %v1367, %v1366
        %v1389 = vpack.c.b16 %v1369, %v1368
        %v1390 = vpack.c.b16 %v1371, %v1370
        %v1391 = vpack.c.b16 %v1373, %v1372
        %v1392 = vpack.c.b16 %v1375, %v1374
        %v1393 = vpack.c.b16 %v1377, %v1376
        %1410 = vmatprep.subr.bf16.mxu0 0
        %1411 = vmatpush1.bf16.msra.mxu0 %v1385
        %1412 = vmatprep.subr.bf16.mxu0 0
        %1413 = vmatpush1.bf16.msra.mxu0 %v1384
        %1414 = vmatprep.subr.bf16.mxu0 0
        %1415 = vmatpush1.bf16.msra.mxu0 %v1383
        %1416 = vmatprep.subr.bf16.mxu0 0
        %1417 = vmatpush1.bf16.msra.mxu0 %v1382
        %1418 = vmatprep.subr.bf16.mxu0 0
        %1419 = vmatpush1.bf16.msra.mxu0 %v1381
        %1420 = vmatprep.subr.bf16.mxu0 0
        %1421 = vmatpush1.bf16.msra.mxu0 %v1380
        %1422 = vmatprep.subr.bf16.mxu0 0
        %1423 = vmatpush1.bf16.msra.mxu0 %v1379
        %1424 = vmatprep.subr.bf16.mxu0 0
        %1425 = vmatpush1.bf16.msra.mxu0 %v1378
        %1426 = vmatprep.subr.bf16.mxu0 0
        %1427 = vmatpush2.bf16.msra.mxu0 %v1393
        %1428 = vmatprep.subr.bf16.mxu0 0
        %1429 = vmatpush2.bf16.msra.mxu0 %v1392
        %1430 = vmatprep.subr.bf16.mxu0 0
        %1431 = vmatpush2.bf16.msra.mxu0 %v1391
        %1432 = vmatprep.subr.bf16.mxu0 0
        %1433 = vmatpush2.bf16.msra.mxu0 %v1390
        %1434 = vmatprep.subr.bf16.mxu0 0
        %1435 = vmatpush2.bf16.msra.mxu0 %v1389
        %1436 = vmatprep.subr.bf16.mxu0 0
        %1437 = vmatpush2.bf16.msra.mxu0 %v1388
        %1438 = vmatprep.subr.bf16.mxu0 0
        %1439 = vmatpush2.bf16.msra.mxu0 %v1387
        %1440 = vmatprep.subr.bf16.mxu0 0
        %1441 = vmatpush2.bf16.msra.mxu0 %v1386
        %1442 = vmatprep.mubr.bf16.mxu0 %v1295
        %1443 = vmatmul.mubr.bf16.gmra.mxu0 %v1294
        %v1444 = vpop.f32.mrf.mxu0
        %v1445 = vadd.f32 %v1313, %v1444
        %v1446 = vpop.f32.mrf.mxu0
        %v1447 = vpop.f32.mrf.mxu0
        %v1448 = vadd.f32 %v1313, %v1447
        %v1449 = vpop.f32.mrf.mxu0
        %1450 = vmatprep.mubr.bf16.mxu0 %v1297
        %1451 = vmatmul.mubr.bf16.gmra.mxu0 %v1296
        %v1452 = vpop.f32.mrf.mxu0
        %v1453 = vadd.f32 %v1313, %v1452
        %v1454 = vpop.f32.mrf.mxu0
        %v1455 = vpop.f32.mrf.mxu0
        %v1456 = vadd.f32 %v1313, %v1455
        %v1457 = vpop.f32.mrf.mxu0
        %1458 = vmatprep.mubr.bf16.mxu0 %v1299
        %1459 = vmatmul.mubr.bf16.gmra.mxu0 %v1298
        %v1460 = vpop.f32.mrf.mxu0
        %v1461 = vadd.f32 %v1313, %v1460
        %v1462 = vpop.f32.mrf.mxu0
        %v1463 = vpop.f32.mrf.mxu0
        %v1464 = vadd.f32 %v1313, %v1463
        %v1465 = vpop.f32.mrf.mxu0
        %1466 = vmatprep.mubr.bf16.mxu0 %v1301
        %1467 = vmatmul.mubr.bf16.gmra.mxu0 %v1300
        %v1468 = vpop.f32.mrf.mxu0
        %v1469 = vadd.f32 %v1313, %v1468
        %v1470 = vpop.f32.mrf.mxu0
        %v1471 = vpop.f32.mrf.mxu0
        %v1472 = vadd.f32 %v1313, %v1471
        %v1473 = vpop.f32.mrf.mxu0
        %1474 = vmatprep.mubr.bf16.mxu0 %v1303
        %1475 = vmatmul.mubr.bf16.gmra.mxu0 %v1302
        %v1476 = vpop.f32.mrf.mxu0
        %v1477 = vadd.f32 %v1313, %v1476
        %v1478 = vpop.f32.mrf.mxu0
        %v1479 = vpop.f32.mrf.mxu0
        %v1480 = vadd.f32 %v1313, %v1479
        %v1481 = vpop.f32.mrf.mxu0
        %1482 = vmatprep.mubr.bf16.mxu0 %v1305
        %1483 = vmatmul.mubr.bf16.gmra.mxu0 %v1304
        %v1484 = vpop.f32.mrf.mxu0
        %v1485 = vadd.f32 %v1313, %v1484
        %v1486 = vpop.f32.mrf.mxu0
        %v1487 = vpop.f32.mrf.mxu0
        %v1488 = vadd.f32 %v1313, %v1487
        %v1489 = vpop.f32.mrf.mxu0
        %1490 = vmatprep.mubr.bf16.mxu0 %v1307
        %1491 = vmatmul.mubr.bf16.gmra.mxu0 %v1306
        %v1492 = vpop.f32.mrf.mxu0
        %v1493 = vadd.f32 %v1313, %v1492
        %v1494 = vpop.f32.mrf.mxu0
        %v1495 = vpop.f32.mrf.mxu0
        %v1496 = vadd.f32 %v1313, %v1495
        %v1497 = vpop.f32.mrf.mxu0
        %1498 = vmatprep.mubr.bf16.mxu0 %v1309
        %1499 = vmatmul.mubr.bf16.gmra.mxu0 %v1308
        %v1500 = vpop.f32.mrf.mxu0
        %v1501 = vadd.f32 %v1313, %v1500
        %v1502 = vpop.f32.mrf.mxu0
        %v1503 = vpop.f32.mrf.mxu0
        %v1504 = vadd.f32 %v1313, %v1503
        %v1505 = vpop.f32.mrf.mxu0
        %1506 = vdwg.mxu0
        %v1507 = vmul.f32 %v1445, %v1445
        %v1508 = vmul.f32 %v1448, %v1448
        %v1509 = vmul.f32 %v1453, %v1453
        %v1510 = vmul.f32 %v1456, %v1456
        %v1511 = vmul.f32 %v1461, %v1461
        %v1512 = vmul.f32 %v1464, %v1464
        %v1513 = vmul.f32 %v1469, %v1469
        %v1514 = vmul.f32 %v1472, %v1472
        %v1515 = vmul.f32 %v1477, %v1477
        %v1516 = vmul.f32 %v1480, %v1480
        %v1517 = vmul.f32 %v1485, %v1485
        %v1518 = vmul.f32 %v1488, %v1488
        %v1519 = vmul.f32 %v1493, %v1493
        %v1520 = vmul.f32 %v1496, %v1496
        %v1521 = vmul.f32 %v1501, %v1501
        %v1522 = vmul.f32 %v1504, %v1504
        %1523 = vadd.xlane.f32.xlu0 %v1507
        %v1524 = vpop.xlane.xlu0 %1523
        %1525 = vadd.xlane.f32.xlu0 %v1508
        %v1526 = vpop.xlane.xlu0 %1525
        %1527 = vadd.xlane.f32.xlu0 %v1509
        %v1528 = vpop.xlane.xlu0 %1527
        %1529 = vadd.xlane.f32.xlu0 %v1510
        %v1530 = vpop.xlane.xlu0 %1529
        %1531 = vadd.xlane.f32.xlu0 %v1511
        %v1532 = vpop.xlane.xlu0 %1531
        %1533 = vadd.xlane.f32.xlu0 %v1512
        %v1534 = vpop.xlane.xlu0 %1533
        %1535 = vadd.xlane.f32.xlu0 %v1513
        %v1536 = vpop.xlane.xlu0 %1535
        %1537 = vadd.xlane.f32.xlu0 %v1514
        %v1538 = vpop.xlane.xlu0 %1537
        %1539 = vadd.xlane.f32.xlu0 %v1515
        %v1540 = vpop.xlane.xlu0 %1539
        %1541 = vadd.xlane.f32.xlu0 %v1516
        %v1542 = vpop.xlane.xlu0 %1541
        %1543 = vadd.xlane.f32.xlu0 %v1517
        %v1544 = vpop.xlane.xlu0 %1543
        %1545 = vadd.xlane.f32.xlu0 %v1518
        %v1546 = vpop.xlane.xlu0 %1545
        %1547 = vadd.xlane.f32.xlu0 %v1519
        %v1548 = vpop.xlane.xlu0 %1547
        %1549 = vadd.xlane.f32.xlu0 %v1520
        %v1550 = vpop.xlane.xlu0 %1549
        %1551 = vadd.xlane.f32.xlu0 %v1521
        %v1552 = vpop.xlane.xlu0 %1551
        %1553 = vadd.xlane.f32.xlu0 %v1522
        %v1554 = vpop.xlane.xlu0 %1553
        %v1555 = vrsqrt.pop %v1524
        %v1556 = vmul.f32 %v1524, %v1555
        %vm1557 = vcmp.eq.f32.partialorder %v1524, inf
        %v1558 = vsel %vm1557, %v1524, %v1556
        %vm1559 = vcmp.eq.f32.partialorder %v1524, 0.0
        %v1560 = vand.u32 %v1524, 2147483648
        %v1561 = vsel %vm1559, %v1560, %v1558
        %v1562 = vrsqrt.pop %v1526
        %v1563 = vmul.f32 %v1526, %v1562
        %vm1564 = vcmp.eq.f32.partialorder %v1526, inf
        %v1565 = vsel %vm1564, %v1526, %v1563
        %vm1566 = vcmp.eq.f32.partialorder %v1526, 0.0
        %v1567 = vand.u32 %v1526, 2147483648
        %v1568 = vsel %vm1566, %v1567, %v1565
        %v1569 = vrsqrt.pop %v1528
        %v1570 = vmul.f32 %v1528, %v1569
        %vm1571 = vcmp.eq.f32.partialorder %v1528, inf
        %v1572 = vsel %vm1571, %v1528, %v1570
        %vm1573 = vcmp.eq.f32.partialorder %v1528, 0.0
        %v1574 = vand.u32 %v1528, 2147483648
        %v1575 = vsel %vm1573, %v1574, %v1572
        %v1576 = vrsqrt.pop %v1530
        %v1577 = vmul.f32 %v1530, %v1576
        %vm1578 = vcmp.eq.f32.partialorder %v1530, inf
        %v1579 = vsel %vm1578, %v1530, %v1577
        %vm1580 = vcmp.eq.f32.partialorder %v1530, 0.0
        %v1581 = vand.u32 %v1530, 2147483648
        %v1582 = vsel %vm1580, %v1581, %v1579
        %v1583 = vrsqrt.pop %v1532
        %v1584 = vmul.f32 %v1532, %v1583
        %vm1585 = vcmp.eq.f32.partialorder %v1532, inf
        %v1586 = vsel %vm1585, %v1532, %v1584
        %vm1587 = vcmp.eq.f32.partialorder %v1532, 0.0
        %v1588 = vand.u32 %v1532, 2147483648
        %v1589 = vsel %vm1587, %v1588, %v1586
        %v1590 = vrsqrt.pop %v1534
        %v1591 = vmul.f32 %v1534, %v1590
        %vm1592 = vcmp.eq.f32.partialorder %v1534, inf
        %v1593 = vsel %vm1592, %v1534, %v1591
        %vm1594 = vcmp.eq.f32.partialorder %v1534, 0.0
        %v1595 = vand.u32 %v1534, 2147483648
        %v1596 = vsel %vm1594, %v1595, %v1593
        %v1597 = vrsqrt.pop %v1536
        %v1598 = vmul.f32 %v1536, %v1597
        %vm1599 = vcmp.eq.f32.partialorder %v1536, inf
        %v1600 = vsel %vm1599, %v1536, %v1598
        %vm1601 = vcmp.eq.f32.partialorder %v1536, 0.0
        %v1602 = vand.u32 %v1536, 2147483648
        %v1603 = vsel %vm1601, %v1602, %v1600
        %v1604 = vrsqrt.pop %v1538
        %v1605 = vmul.f32 %v1538, %v1604
        %vm1606 = vcmp.eq.f32.partialorder %v1538, inf
        %v1607 = vsel %vm1606, %v1538, %v1605
        %vm1608 = vcmp.eq.f32.partialorder %v1538, 0.0
        %v1609 = vand.u32 %v1538, 2147483648
        %v1610 = vsel %vm1608, %v1609, %v1607
        %v1611 = vrsqrt.pop %v1540
        %v1612 = vmul.f32 %v1540, %v1611
        %vm1613 = vcmp.eq.f32.partialorder %v1540, inf
        %v1614 = vsel %vm1613, %v1540, %v1612
        %vm1615 = vcmp.eq.f32.partialorder %v1540, 0.0
        %v1616 = vand.u32 %v1540, 2147483648
        %v1617 = vsel %vm1615, %v1616, %v1614
        %v1618 = vrsqrt.pop %v1542
        %v1619 = vmul.f32 %v1542, %v1618
        %vm1620 = vcmp.eq.f32.partialorder %v1542, inf
        %v1621 = vsel %vm1620, %v1542, %v1619
        %vm1622 = vcmp.eq.f32.partialorder %v1542, 0.0
        %v1623 = vand.u32 %v1542, 2147483648
        %v1624 = vsel %vm1622, %v1623, %v1621
        %v1625 = vrsqrt.pop %v1544
        %v1626 = vmul.f32 %v1544, %v1625
        %vm1627 = vcmp.eq.f32.partialorder %v1544, inf
        %v1628 = vsel %vm1627, %v1544, %v1626
        %vm1629 = vcmp.eq.f32.partialorder %v1544, 0.0
        %v1630 = vand.u32 %v1544, 2147483648
        %v1631 = vsel %vm1629, %v1630, %v1628
        %v1632 = vrsqrt.pop %v1546
        %v1633 = vmul.f32 %v1546, %v1632
        %vm1634 = vcmp.eq.f32.partialorder %v1546, inf
        %v1635 = vsel %vm1634, %v1546, %v1633
        %vm1636 = vcmp.eq.f32.partialorder %v1546, 0.0
        %v1637 = vand.u32 %v1546, 2147483648
        %v1638 = vsel %vm1636, %v1637, %v1635
        %v1639 = vrsqrt.pop %v1548
        %v1640 = vmul.f32 %v1548, %v1639
        %vm1641 = vcmp.eq.f32.partialorder %v1548, inf
        %v1642 = vsel %vm1641, %v1548, %v1640
        %vm1643 = vcmp.eq.f32.partialorder %v1548, 0.0
        %v1644 = vand.u32 %v1548, 2147483648
        %v1645 = vsel %vm1643, %v1644, %v1642
        %v1646 = vrsqrt.pop %v1550
        %v1647 = vmul.f32 %v1550, %v1646
        %vm1648 = vcmp.eq.f32.partialorder %v1550, inf
        %v1649 = vsel %vm1648, %v1550, %v1647
        %vm1650 = vcmp.eq.f32.partialorder %v1550, 0.0
        %v1651 = vand.u32 %v1550, 2147483648
        %v1652 = vsel %vm1650, %v1651, %v1649
        %v1653 = vrsqrt.pop %v1552
        %v1654 = vmul.f32 %v1552, %v1653
        %vm1655 = vcmp.eq.f32.partialorder %v1552, inf
        %v1656 = vsel %vm1655, %v1552, %v1654
        %vm1657 = vcmp.eq.f32.partialorder %v1552, 0.0
        %v1658 = vand.u32 %v1552, 2147483648
        %v1659 = vsel %vm1657, %v1658, %v1656
        %v1660 = vrsqrt.pop %v1554
        %v1661 = vmul.f32 %v1554, %v1660
        %vm1662 = vcmp.eq.f32.partialorder %v1554, inf
        %v1663 = vsel %vm1662, %v1554, %v1661
        %vm1664 = vcmp.eq.f32.partialorder %v1554, 0.0
        %v1665 = vand.u32 %v1554, 2147483648
        %v1666 = vsel %vm1664, %v1665, %v1663
        %v1667 = vmax.f32 %v1561, 1e-12
        %v1668 = vmax.f32 %v1568, 1e-12
        %v1669 = vmax.f32 %v1575, 1e-12
        %v1670 = vmax.f32 %v1582, 1e-12
        %v1671 = vmax.f32 %v1589, 1e-12
        %v1672 = vmax.f32 %v1596, 1e-12
        %v1673 = vmax.f32 %v1603, 1e-12
        %v1674 = vmax.f32 %v1610, 1e-12
        %v1675 = vmax.f32 %v1617, 1e-12
        %v1676 = vmax.f32 %v1624, 1e-12
        %v1677 = vmax.f32 %v1631, 1e-12
        %v1678 = vmax.f32 %v1638, 1e-12
        %v1679 = vmax.f32 %v1645, 1e-12
        %v1680 = vmax.f32 %v1652, 1e-12
        %v1681 = vmax.f32 %v1659, 1e-12
        %v1682 = vmax.f32 %v1666, 1e-12
        %v1683 = vrcp.pop %v1667
        %v1684 = vmul.f32 %v1445, %v1683
        %v1685 = vrcp.pop %v1668
        %v1686 = vmul.f32 %v1448, %v1685
        %v1687 = vrcp.pop %v1669
        %v1688 = vmul.f32 %v1453, %v1687
        %v1689 = vrcp.pop %v1670
        %v1690 = vmul.f32 %v1456, %v1689
        %v1691 = vrcp.pop %v1671
        %v1692 = vmul.f32 %v1461, %v1691
        %v1693 = vrcp.pop %v1672
        %v1694 = vmul.f32 %v1464, %v1693
        %v1695 = vrcp.pop %v1673
        %v1696 = vmul.f32 %v1469, %v1695
        %v1697 = vrcp.pop %v1674
        %v1698 = vmul.f32 %v1472, %v1697
        %v1699 = vrcp.pop %v1675
        %v1700 = vmul.f32 %v1477, %v1699
        %v1701 = vrcp.pop %v1676
        %v1702 = vmul.f32 %v1480, %v1701
        %v1703 = vrcp.pop %v1677
        %v1704 = vmul.f32 %v1485, %v1703
        %v1705 = vrcp.pop %v1678
        %v1706 = vmul.f32 %v1488, %v1705
        %v1707 = vrcp.pop %v1679
        %v1708 = vmul.f32 %v1493, %v1707
        %v1709 = vrcp.pop %v1680
        %v1710 = vmul.f32 %v1496, %v1709
        %v1711 = vrcp.pop %v1681
        %v1712 = vmul.f32 %v1501, %v1711
        %v1713 = vrcp.pop %v1682
        %v1714 = vmul.f32 %v1504, %v1713
        %v1715 = vmul.f32 %v379, %v379
        %v1716 = vmul.f32 %v380, %v380
        %v1717 = vmul.f32 %v381, %v381
        %v1718 = vmul.f32 %v382, %v382
        %v1719 = vmul.f32 %v383, %v383
        %v1720 = vmul.f32 %v384, %v384
        %v1721 = vmul.f32 %v385, %v385
        %v1722 = vmul.f32 %v386, %v386
        %v1723 = vmul.f32 %v387, %v387
        %v1724 = vmul.f32 %v388, %v388
        %v1725 = vmul.f32 %v389, %v389
        %v1726 = vmul.f32 %v390, %v390
        %v1727 = vmul.f32 %v391, %v391
        %v1728 = vmul.f32 %v392, %v392
        %v1729 = vmul.f32 %v393, %v393
        %v1730 = vmul.f32 %v394, %v394
        %1731 = vadd.xlane.f32.xlu0 %v1715
        %v1732 = vpop.xlane.xlu0 %1731
        %1733 = vadd.xlane.f32.xlu0 %v1716
        %v1734 = vpop.xlane.xlu0 %1733
        %1735 = vadd.xlane.f32.xlu0 %v1717
        %v1736 = vpop.xlane.xlu0 %1735
        %1737 = vadd.xlane.f32.xlu0 %v1718
        %v1738 = vpop.xlane.xlu0 %1737
        %1739 = vadd.xlane.f32.xlu0 %v1719
        %v1740 = vpop.xlane.xlu0 %1739
        %1741 = vadd.xlane.f32.xlu0 %v1720
        %v1742 = vpop.xlane.xlu0 %1741
        %1743 = vadd.xlane.f32.xlu0 %v1721
        %v1744 = vpop.xlane.xlu0 %1743
        %1745 = vadd.xlane.f32.xlu0 %v1722
        %v1746 = vpop.xlane.xlu0 %1745
        %1747 = vadd.xlane.f32.xlu0 %v1723
        %v1748 = vpop.xlane.xlu0 %1747
        %1749 = vadd.xlane.f32.xlu0 %v1724
        %v1750 = vpop.xlane.xlu0 %1749
        %1751 = vadd.xlane.f32.xlu0 %v1725
        %v1752 = vpop.xlane.xlu0 %1751
        %1753 = vadd.xlane.f32.xlu0 %v1726
        %v1754 = vpop.xlane.xlu0 %1753
        %1755 = vadd.xlane.f32.xlu0 %v1727
        %v1756 = vpop.xlane.xlu0 %1755
        %1757 = vadd.xlane.f32.xlu0 %v1728
        %v1758 = vpop.xlane.xlu0 %1757
        %1759 = vadd.xlane.f32.xlu0 %v1729
        %v1760 = vpop.xlane.xlu0 %1759
        %1761 = vadd.xlane.f32.xlu0 %v1730
        %v1762 = vpop.xlane.xlu0 %1761
        %v1763 = vrsqrt.pop %v1732
        %v1764 = vmul.f32 %v1732, %v1763
        %vm1765 = vcmp.eq.f32.partialorder %v1732, inf
        %v1766 = vsel %vm1765, %v1732, %v1764
        %vm1767 = vcmp.eq.f32.partialorder %v1732, 0.0
        %v1768 = vand.u32 %v1732, 2147483648
        %v1769 = vsel %vm1767, %v1768, %v1766
        %v1770 = vrsqrt.pop %v1734
        %v1771 = vmul.f32 %v1734, %v1770
        %vm1772 = vcmp.eq.f32.partialorder %v1734, inf
        %v1773 = vsel %vm1772, %v1734, %v1771
        %vm1774 = vcmp.eq.f32.partialorder %v1734, 0.0
        %v1775 = vand.u32 %v1734, 2147483648
        %v1776 = vsel %vm1774, %v1775, %v1773
        %v1777 = vrsqrt.pop %v1736
        %v1778 = vmul.f32 %v1736, %v1777
        %vm1779 = vcmp.eq.f32.partialorder %v1736, inf
        %v1780 = vsel %vm1779, %v1736, %v1778
        %vm1781 = vcmp.eq.f32.partialorder %v1736, 0.0
        %v1782 = vand.u32 %v1736, 2147483648
        %v1783 = vsel %vm1781, %v1782, %v1780
        %v1784 = vrsqrt.pop %v1738
        %v1785 = vmul.f32 %v1738, %v1784
        %vm1786 = vcmp.eq.f32.partialorder %v1738, inf
        %v1787 = vsel %vm1786, %v1738, %v1785
        %vm1788 = vcmp.eq.f32.partialorder %v1738, 0.0
        %v1789 = vand.u32 %v1738, 2147483648
        %v1790 = vsel %vm1788, %v1789, %v1787
        %v1791 = vrsqrt.pop %v1740
        %v1792 = vmul.f32 %v1740, %v1791
        %vm1793 = vcmp.eq.f32.partialorder %v1740, inf
        %v1794 = vsel %vm1793, %v1740, %v1792
        %vm1795 = vcmp.eq.f32.partialorder %v1740, 0.0
        %v1796 = vand.u32 %v1740, 2147483648
        %v1797 = vsel %vm1795, %v1796, %v1794
        %v1798 = vrsqrt.pop %v1742
        %v1799 = vmul.f32 %v1742, %v1798
        %vm1800 = vcmp.eq.f32.partialorder %v1742, inf
        %v1801 = vsel %vm1800, %v1742, %v1799
        %vm1802 = vcmp.eq.f32.partialorder %v1742, 0.0
        %v1803 = vand.u32 %v1742, 2147483648
        %v1804 = vsel %vm1802, %v1803, %v1801
        %v1805 = vrsqrt.pop %v1744
        %v1806 = vmul.f32 %v1744, %v1805
        %vm1807 = vcmp.eq.f32.partialorder %v1744, inf
        %v1808 = vsel %vm1807, %v1744, %v1806
        %vm1809 = vcmp.eq.f32.partialorder %v1744, 0.0
        %v1810 = vand.u32 %v1744, 2147483648
        %v1811 = vsel %vm1809, %v1810, %v1808
        %v1812 = vrsqrt.pop %v1746
        %v1813 = vmul.f32 %v1746, %v1812
        %vm1814 = vcmp.eq.f32.partialorder %v1746, inf
        %v1815 = vsel %vm1814, %v1746, %v1813
        %vm1816 = vcmp.eq.f32.partialorder %v1746, 0.0
        %v1817 = vand.u32 %v1746, 2147483648
        %v1818 = vsel %vm1816, %v1817, %v1815
        %v1819 = vrsqrt.pop %v1748
        %v1820 = vmul.f32 %v1748, %v1819
        %vm1821 = vcmp.eq.f32.partialorder %v1748, inf
        %v1822 = vsel %vm1821, %v1748, %v1820
        %vm1823 = vcmp.eq.f32.partialorder %v1748, 0.0
        %v1824 = vand.u32 %v1748, 2147483648
        %v1825 = vsel %vm1823, %v1824, %v1822
        %v1826 = vrsqrt.pop %v1750
        %v1827 = vmul.f32 %v1750, %v1826
        %vm1828 = vcmp.eq.f32.partialorder %v1750, inf
        %v1829 = vsel %vm1828, %v1750, %v1827
        %vm1830 = vcmp.eq.f32.partialorder %v1750, 0.0
        %v1831 = vand.u32 %v1750, 2147483648
        %v1832 = vsel %vm1830, %v1831, %v1829
        %v1833 = vrsqrt.pop %v1752
        %v1834 = vmul.f32 %v1752, %v1833
        %vm1835 = vcmp.eq.f32.partialorder %v1752, inf
        %v1836 = vsel %vm1835, %v1752, %v1834
        %vm1837 = vcmp.eq.f32.partialorder %v1752, 0.0
        %v1838 = vand.u32 %v1752, 2147483648
        %v1839 = vsel %vm1837, %v1838, %v1836
        %v1840 = vrsqrt.pop %v1754
        %v1841 = vmul.f32 %v1754, %v1840
        %vm1842 = vcmp.eq.f32.partialorder %v1754, inf
        %v1843 = vsel %vm1842, %v1754, %v1841
        %vm1844 = vcmp.eq.f32.partialorder %v1754, 0.0
        %v1845 = vand.u32 %v1754, 2147483648
        %v1846 = vsel %vm1844, %v1845, %v1843
        %v1847 = vrsqrt.pop %v1756
        %v1848 = vmul.f32 %v1756, %v1847
        %vm1849 = vcmp.eq.f32.partialorder %v1756, inf
        %v1850 = vsel %vm1849, %v1756, %v1848
        %vm1851 = vcmp.eq.f32.partialorder %v1756, 0.0
        %v1852 = vand.u32 %v1756, 2147483648
        %v1853 = vsel %vm1851, %v1852, %v1850
        %v1854 = vrsqrt.pop %v1758
        %v1855 = vmul.f32 %v1758, %v1854
        %vm1856 = vcmp.eq.f32.partialorder %v1758, inf
        %v1857 = vsel %vm1856, %v1758, %v1855
        %vm1858 = vcmp.eq.f32.partialorder %v1758, 0.0
        %v1859 = vand.u32 %v1758, 2147483648
        %v1860 = vsel %vm1858, %v1859, %v1857
        %v1861 = vrsqrt.pop %v1760
        %v1862 = vmul.f32 %v1760, %v1861
        %vm1863 = vcmp.eq.f32.partialorder %v1760, inf
        %v1864 = vsel %vm1863, %v1760, %v1862
        %vm1865 = vcmp.eq.f32.partialorder %v1760, 0.0
        %v1866 = vand.u32 %v1760, 2147483648
        %v1867 = vsel %vm1865, %v1866, %v1864
        %v1868 = vrsqrt.pop %v1762
        %v1869 = vmul.f32 %v1762, %v1868
        %vm1870 = vcmp.eq.f32.partialorder %v1762, inf
        %v1871 = vsel %vm1870, %v1762, %v1869
        %vm1872 = vcmp.eq.f32.partialorder %v1762, 0.0
        %v1873 = vand.u32 %v1762, 2147483648
        %v1874 = vsel %vm1872, %v1873, %v1871
        %v1875 = vmax.f32 %v1769, 1e-12
        %v1876 = vmax.f32 %v1776, 1e-12
        %v1877 = vmax.f32 %v1783, 1e-12
        %v1878 = vmax.f32 %v1790, 1e-12
        %v1879 = vmax.f32 %v1797, 1e-12
        %v1880 = vmax.f32 %v1804, 1e-12
        %v1881 = vmax.f32 %v1811, 1e-12
        %v1882 = vmax.f32 %v1818, 1e-12
        %v1883 = vmax.f32 %v1825, 1e-12
        %v1884 = vmax.f32 %v1832, 1e-12
        %v1885 = vmax.f32 %v1839, 1e-12
        %v1886 = vmax.f32 %v1846, 1e-12
        %v1887 = vmax.f32 %v1853, 1e-12
        %v1888 = vmax.f32 %v1860, 1e-12
        %v1889 = vmax.f32 %v1867, 1e-12
        %v1890 = vmax.f32 %v1874, 1e-12
        %v1891 = vrcp.pop %v1875
        %v1892 = vmul.f32 %v379, %v1891
        %v1893 = vrcp.pop %v1876
        %v1894 = vmul.f32 %v380, %v1893
        %v1895 = vrcp.pop %v1877
        %v1896 = vmul.f32 %v381, %v1895
        %v1897 = vrcp.pop %v1878
        %v1898 = vmul.f32 %v382, %v1897
        %v1899 = vrcp.pop %v1879
        %v1900 = vmul.f32 %v383, %v1899
        %v1901 = vrcp.pop %v1880
        %v1902 = vmul.f32 %v384, %v1901
        %v1903 = vrcp.pop %v1881
        %v1904 = vmul.f32 %v385, %v1903
        %v1905 = vrcp.pop %v1882
        %v1906 = vmul.f32 %v386, %v1905
        %v1907 = vrcp.pop %v1883
        %v1908 = vmul.f32 %v387, %v1907
        %v1909 = vrcp.pop %v1884
        %v1910 = vmul.f32 %v388, %v1909
        %v1911 = vrcp.pop %v1885
        %v1912 = vmul.f32 %v389, %v1911
        %v1913 = vrcp.pop %v1886
        %v1914 = vmul.f32 %v390, %v1913
        %v1915 = vrcp.pop %v1887
        %v1916 = vmul.f32 %v391, %v1915
        %v1917 = vrcp.pop %v1888
        %v1918 = vmul.f32 %v392, %v1917
        %v1919 = vrcp.pop %v1889
        %v1920 = vmul.f32 %v393, %v1919
        %v1921 = vrcp.pop %v1890
        %v1922 = vmul.f32 %v394, %v1921
        %v1923 = vpack.c.bf16 %v1686, %v1684
        %v1924 = vpack.c.bf16 %v1690, %v1688
        %v1925 = vpack.c.bf16 %v1694, %v1692
        %v1926 = vpack.c.bf16 %v1698, %v1696
        %v1927 = vpack.c.bf16 %v1702, %v1700
        %v1928 = vpack.c.bf16 %v1706, %v1704
        %v1929 = vpack.c.bf16 %v1710, %v1708
        %v1930 = vpack.c.bf16 %v1714, %v1712
        %v1931 = vpack.c.bf16 %v1894, %v1892
        %v1932 = vpack.c.bf16 %v1898, %v1896
        %v1933 = vpack.c.bf16 %v1902, %v1900
        %v1934 = vpack.c.bf16 %v1906, %v1904
        %v1935 = vpack.c.bf16 %v1910, %v1908
        %v1936 = vpack.c.bf16 %v1914, %v1912
        %v1937 = vpack.c.bf16 %v1918, %v1916
        %v1938 = vpack.c.bf16 %v1922, %v1920
        %1939 = vmatprep.subr.bf16.mxu0 0
        %1940 = vmatpush1.bf16.xpose.msra.mxu0 %v1938
        %1941 = vmatprep.subr.bf16.mxu0 0
        %1942 = vmatpush1.bf16.xpose.msra.mxu0 %v1937
        %1943 = vmatprep.subr.bf16.mxu0 0
        %1944 = vmatpush1.bf16.xpose.msra.mxu0 %v1936
        %1945 = vmatprep.subr.bf16.mxu0 0
        %1946 = vmatpush1.bf16.xpose.msra.mxu0 %v1935
        %1947 = vmatprep.subr.bf16.mxu0 0
        %1948 = vmatpush1.bf16.xpose.msra.mxu0 %v1934
        %1949 = vmatprep.subr.bf16.mxu0 0
        %1950 = vmatpush1.bf16.xpose.msra.mxu0 %v1933
        %1951 = vmatprep.subr.bf16.mxu0 0
        %1952 = vmatpush1.bf16.xpose.msra.mxu0 %v1932
        %1953 = vmatprep.subr.bf16.mxu0 0
        %1954 = vmatpush1.bf16.xpose.msra.mxu0 %v1931
        %1955 = vmatprep.subr.bf16.mxu0 0
        %1956 = vmatpush2.bf16.xpose.msra.mxu0 0
        %1957 = vmatprep.subr.bf16.mxu0 0
        %1958 = vmatpush2.bf16.xpose.msra.mxu0 0
        %1959 = vmatprep.subr.bf16.mxu0 0
        %1960 = vmatpush2.bf16.xpose.msra.mxu0 0
        %1961 = vmatprep.subr.bf16.mxu0 0
        %1962 = vmatpush2.bf16.xpose.msra.mxu0 0
        %1963 = vmatprep.subr.bf16.mxu0 0
        %1964 = vmatpush2.bf16.xpose.msra.mxu0 0
        %1965 = vmatprep.subr.bf16.mxu0 0
        %1966 = vmatpush2.bf16.xpose.msra.mxu0 0
        %1967 = vmatprep.subr.bf16.mxu0 0
        %1968 = vmatpush2.bf16.xpose.msra.mxu0 0
        %1969 = vmatprep.subr.bf16.mxu0 0
        %1970 = vmatpush2.bf16.xpose.msra.mxu0 0
        %1971 = vmatprep.mubr.bf16.mxu0 0
        %1972 = vmatmul.mubr.bf16.gmra.mxu0 %v1923
        %v1973 = vpop.f32.mrf.mxu0
        %v1974 = vadd.f32 0.0, %v1973
        %v1975 = vpop.f32.mrf.mxu0
        %v1976 = vpop.f32.mrf.mxu0
        %v1977 = vadd.f32 0.0, %v1976
        %v1978 = vpop.f32.mrf.mxu0
        %1979 = vmatprep.mubr.bf16.mxu0 0
        %1980 = vmatmul.mubr.bf16.gmra.mxu0 %v1924
        %v1981 = vpop.f32.mrf.mxu0
        %v1982 = vadd.f32 0.0, %v1981
        %v1983 = vpop.f32.mrf.mxu0
        %v1984 = vpop.f32.mrf.mxu0
        %v1985 = vadd.f32 0.0, %v1984
        %v1986 = vpop.f32.mrf.mxu0
        %1987 = vmatprep.mubr.bf16.mxu0 0
        %1988 = vmatmul.mubr.bf16.gmra.mxu0 %v1925
        %v1989 = vpop.f32.mrf.mxu0
        %v1990 = vadd.f32 0.0, %v1989
        %v1991 = vpop.f32.mrf.mxu0
        %v1992 = vpop.f32.mrf.mxu0
        %v1993 = vadd.f32 0.0, %v1992
        %v1994 = vpop.f32.mrf.mxu0
        %1995 = vmatprep.mubr.bf16.mxu0 0
        %1996 = vmatmul.mubr.bf16.gmra.mxu0 %v1926
        %v1997 = vpop.f32.mrf.mxu0
        %v1998 = vadd.f32 0.0, %v1997
        %v1999 = vpop.f32.mrf.mxu0
        %v2000 = vpop.f32.mrf.mxu0
        %v2001 = vadd.f32 0.0, %v2000
        %v2002 = vpop.f32.mrf.mxu0
        %2003 = vmatprep.mubr.bf16.mxu0 0
        %2004 = vmatmul.mubr.bf16.gmra.mxu0 %v1927
        %v2005 = vpop.f32.mrf.mxu0
        %v2006 = vadd.f32 0.0, %v2005
        %v2007 = vpop.f32.mrf.mxu0
        %v2008 = vpop.f32.mrf.mxu0
        %v2009 = vadd.f32 0.0, %v2008
        %v2010 = vpop.f32.mrf.mxu0
        %2011 = vmatprep.mubr.bf16.mxu0 0
        %2012 = vmatmul.mubr.bf16.gmra.mxu0 %v1928
        %v2013 = vpop.f32.mrf.mxu0
        %v2014 = vadd.f32 0.0, %v2013
        %v2015 = vpop.f32.mrf.mxu0
        %v2016 = vpop.f32.mrf.mxu0
        %v2017 = vadd.f32 0.0, %v2016
        %v2018 = vpop.f32.mrf.mxu0
        %2019 = vmatprep.mubr.bf16.mxu0 0
        %2020 = vmatmul.mubr.bf16.gmra.mxu0 %v1929
        %v2021 = vpop.f32.mrf.mxu0
        %v2022 = vadd.f32 0.0, %v2021
        %v2023 = vpop.f32.mrf.mxu0
        %v2024 = vpop.f32.mrf.mxu0
        %v2025 = vadd.f32 0.0, %v2024
        %v2026 = vpop.f32.mrf.mxu0
        %2027 = vmatprep.mubr.bf16.mxu0 0
        %2028 = vmatmul.mubr.bf16.gmra.mxu0 %v1930
        %v2029 = vpop.f32.mrf.mxu0
        %v2030 = vadd.f32 0.0, %v2029
        %v2031 = vpop.f32.mrf.mxu0
        %v2032 = vpop.f32.mrf.mxu0
        %v2033 = vadd.f32 0.0, %v2032
        %v2034 = vpop.f32.mrf.mxu0
        %2035 = vdwg.mxu0
        %2036 = vst [vmem:[%s247] sm:$0xff] %v1974
        %2037 = vst [vmem:[%s247 + $0x8] sm:$0xff] %v1977
        %2038 = vst [vmem:[%s247 + $0x10] sm:$0xff] %v1982
        %2039 = vst [vmem:[%s247 + $0x18] sm:$0xff] %v1985
        %2040 = vst [vmem:[%s247 + $0x20] sm:$0xff] %v1990
        %2041 = vst [vmem:[%s247 + $0x28] sm:$0xff] %v1993
        %2042 = vst [vmem:[%s247 + $0x30] sm:$0xff] %v1998
        %2043 = vst [vmem:[%s247 + $0x38] sm:$0xff] %v2001
        %2044 = vst [vmem:[%s247 + $0x40] sm:$0xff] %v2006
        %2045 = vst [vmem:[%s247 + $0x48] sm:$0xff] %v2009
        %2046 = vst [vmem:[%s247 + $0x50] sm:$0xff] %v2014
        %2047 = vst [vmem:[%s247 + $0x58] sm:$0xff] %v2017
        %2048 = vst [vmem:[%s247 + $0x60] sm:$0xff] %v2022
        %2049 = vst [vmem:[%s247 + $0x68] sm:$0xff] %v2025
        %2050 = vst [vmem:[%s247 + $0x70] sm:$0xff] %v2030
        %2051 = vst [vmem:[%s247 + $0x78] sm:$0xff] %v2033
        %s2052 = sand.u32 %s159, 1
        %s2053 = scalar_lea.sflag [#allocation3], %s2052
        %s2054 = sand.u32 %s159, 1
        %s2055 = smul.addr %s2054, 128
        %s2056 = scalar_lea.vmem [#allocation2], %s2055
        // Predicated region
        $region45: #{tpu_custom_call.1} parent=43 // pred_check
          %p2057 = pneg %p169
        $region46: #{tpu_custom_call.1} parent=43 // pred_check_branch
          %2059 = sbr.rel (%p2057) target = $region48
        $region47: #{tpu_custom_call.1} parent=43 // pred_region
          %s2060 = smul.u32 16, %s20
          %s2062 = ssub.s32 2048, 2048
          %2063 = vsyncadd %s2053, %s2062
          %s2064 = smul.addr %s2060, 128
          %s2065 = scalar_lea.hbm %s6, %s2064
          %s2066 = sshll.u32 %s2056, 4
          %s2067 = int_to_ptr.vmem [resolvable:$true] %s2066
          %2072 = dma.vmem_to_hbm [thread:$0]  %s2067, 2048, %s2065, %s2053, 128, 128, 8
        $region48: #{tpu_custom_call.1} parent=43 // pred_fallthru
          _
      $region44: #{tpu_custom_call.1} parent=5 // pred_fallthru
        _
      %p2073 = scmp.le.s32.totalorder 2, %s15
      // Predicated region
      $region49: #{tpu_custom_call.1} parent=5 // pred_check
        %p2074 = pneg %p2073
      $region50: #{tpu_custom_call.1} parent=5 // pred_check_branch
        %2076 = sbr.rel (%p2074) target = $region52
      $region51: #{tpu_custom_call.1} parent=5 // pred_region
        %s2077 = ssub.s32 %s15, 2
        // Predicated region
        $region53: #{tpu_custom_call.1} parent=51 // pred_check
          %p2078 = pneg %p175
        $region54: #{tpu_custom_call.1} parent=51 // pred_check_branch
          %2080 = sbr.rel (%p2078) target = $region56
        $region55: #{tpu_custom_call.1} parent=51 // pred_region
          %s2081 = sand.u32 %s160, 1
          %s2082 = scalar_lea.sflag [#allocation3], %s2081
          %s2083 = sand.u32 %s160, 1
          %s2084 = smul.addr %s2083, 128
          %s2085 = scalar_lea.vmem [#allocation2], %s2084
          %2086 = dma.done %s2082, 2048
        $region56: #{tpu_custom_call.1} parent=51 // pred_fallthru
          _
      $region52: #{tpu_custom_call.1} parent=5 // pred_fallthru
        _
    $region6: #{tpu_custom_call.1} parent=1 // loop_footer
      %s19 = sadd.s32 1, %s15
    $region7: #{tpu_custom_call.1} parent=1 // loop_footer_branch
      %14 = sbr.rel target = $region3
    $region8: #{tpu_custom_call.1} parent=1 // loop_exit
      _
    %2087 = vsyncpa [#allocation3], 1
    %s2088 = scalar_lea.sflag [#allocation3], 1
    %2089 = vsyncpa %s2088, 1

</llo_original>
